<compile_context>
chip_gen: v7x
topology: tpu7x:2x2x1
jax: 0.10.0
libtpu: 0.0.40
codegen_flags: <defaults>
</compile_context>

<pallas_src>
import functools

import jax
import jax.numpy as jnp
from jax.experimental import pallas as pl
from jax.experimental.pallas import tpu as pltpu


# --------------------------- Parameter packing ------------------------------ #

def pack_params(params, n_layers, hidden):
    """Pack every small parameter into one (K, hidden) f32 slab.

    Segments are padded to multiples of 8 rows so in-kernel slices stay
    sublane-tile aligned.  Call once at init time (like nn.Module param init).
    """
    f32 = jnp.float32
    segs, off = [], {}
    cur = 0

    def add(name, arr):
        nonlocal cur
        arr = arr.astype(f32).reshape(-1, hidden)
        pad = (-arr.shape[0]) % 8
        if pad:
            arr = jnp.concatenate([arr, jnp.zeros((pad, hidden), f32)], axis=0)
        off[name] = cur
        segs.append(arr)
        cur += arr.shape[0]

    add("emb_w0", params["emb_w0"])
    add("emb_w1", params["emb_w1"])
    add("edge_table", params["edge_table"])
    for l in range(n_layers):
        add(f"gine_w0_{l}", params["gine_w0"][l])
    for l in range(n_layers):
        add(f"gine_w1_{l}", params["gine_w1"][l])

    # bias / eps block: one 8-aligned block; rows = [emb_b0, emb_b1,
    # gine_b0[0..L-1], gine_b1[0..L-1], eps-row]
    eps_row = jnp.zeros((1, hidden), f32).at[0, :n_layers].set(
        params["gine_eps"].astype(f32))
    bias_blk = jnp.concatenate(
        [params["emb_b0"].reshape(1, hidden),
         params["emb_b1"].reshape(1, hidden)]
        + [params["gine_b0"][l].reshape(1, hidden) for l in range(n_layers)]
        + [params["gine_b1"][l].reshape(1, hidden) for l in range(n_layers)]
        + [eps_row],
        axis=0)
    add("bias_blk", bias_blk)

    slab = jnp.concatenate(segs, axis=0)
    return slab, off


# ------------------------------ Fused kernel ------------------------------- #

def _gnn_fused_kernel(
    feat_ref,    # (N, IN)        f32  raw node features
    edges_ref,   # (3, M)         i32  rows: [edge_type, edge_src, edge_dst]
    w_ref,       # (K, H)         f32  packed parameter slab
    out_ref,     # (B, max_n, 2*F_PAD) f32  lane-dense output
    feats_ref,   # (N, F_PAD)     f32  VMEM scratch: concatenated features_list
    *, off, n_layers, in_dim, hidden, n_edge_types,
    batch_size, n_nodes, max_n_nodes, f_pad,
):
    f32 = jnp.float32
    i32 = jnp.int32
    N = feat_ref.shape[0]
    M = edges_ref.shape[1]
    H = hidden

    # static row offsets inside the bias/eps block
    bias0 = off["bias_blk"]
    r_emb_b0 = bias0
    r_emb_b1 = bias0 + 1
    r_gine_b0 = bias0 + 2
    r_gine_b1 = bias0 + 2 + n_layers
    r_eps = bias0 + 2 + 2 * n_layers

    x = feat_ref[...]                                                   # (N, IN)

    # ---- embedder MLP: relu(x @ W0 + b0) @ W1 + b1 ----
    emb_w0 = w_ref[off["emb_w0"]:off["emb_w0"] + in_dim, :]
    emb_w1 = w_ref[off["emb_w1"]:off["emb_w1"] + H, :]
    h = jnp.maximum(jnp.dot(x, emb_w0, preferred_element_type=f32)
                    + w_ref[r_emb_b0:r_emb_b0 + 1, :], 0.0)
    h = (jnp.dot(h, emb_w1, preferred_element_type=f32)
         + w_ref[r_emb_b1:r_emb_b1 + 1, :])                             # (N, H)

    # ---- edge-type embedding lookup: one_hot(type)^T @ table (MXU) ----
    etype = edges_ref[0:1, :]                                           # (1, M)
    esrc = edges_ref[1:2, :]
    edst = edges_ref[2:3, :]
    type_oh = (jax.lax.broadcasted_iota(i32, (n_edge_types, M), 0)
               == etype).astype(f32)                                    # (T, M)
    edge_table = w_ref[off["edge_table"]:off["edge_table"] + n_edge_types, :]
    e_emb = jax.lax.dot_general(type_oh, edge_table, (((0,), (0,)), ((), ())),
                                preferred_element_type=f32)             # (M, H)

    # ---- message-passing operators (loop-invariant, 0/1 valued) ----
    src_oh = (jax.lax.broadcasted_iota(i32, (N, M), 0) == esrc).astype(f32)  # (N,M)
    dst_oh = (jax.lax.broadcasted_iota(i32, (N, M), 0) == edst).astype(f32)  # (N,M)

    # ---- features_list written into a 128-wide scratch (no lane concat) ----
    feats_ref[...] = jnp.zeros(feats_ref.shape, f32)
    feats_ref[:, 0:in_dim] = x
    feats_ref[:, in_dim:in_dim + H] = h

    # ---- GINE layers (learn_eps) + apply_func MLP + residual ----
    for layer in range(n_layers):
        one_plus_eps = 1.0 + w_ref[r_eps:r_eps + 1, layer:layer + 1]    # (1, 1)
        # per-edge message: relu(h_src + e_emb)   (src gather via one-hot^T @ h)
        h_src = jax.lax.dot_general(src_oh, h, (((0,), (0,)), ((), ())),
                                    preferred_element_type=f32)         # (M, H)
        msg = jnp.maximum(h_src + e_emb, 0.0)
        # sum-aggregate onto destination nodes
        neigh = jnp.dot(dst_oh, msg, preferred_element_type=f32)        # (N, H)
        rst = h * one_plus_eps + neigh
        # apply_func: 2-layer MLP with relu between
        gw0 = w_ref[off[f"gine_w0_{layer}"]:off[f"gine_w0_{layer}"] + H, :]
        gw1 = w_ref[off[f"gine_w1_{layer}"]:off[f"gine_w1_{layer}"] + H, :]
        gb0 = w_ref[r_gine_b0 + layer:r_gine_b0 + layer + 1, :]
        gb1 = w_ref[r_gine_b1 + layer:r_gine_b1 + layer + 1, :]
        hid = jnp.maximum(jnp.dot(rst, gw0, preferred_element_type=f32) + gb0, 0.0)
        h = jnp.dot(hid, gw1, preferred_element_type=f32) + gb1 + h     # residual
        col = in_dim + H * (layer + 1)
        feats_ref[:, col:col + H] = h

    feats = feats_ref[...]                                              # (N, F_PAD)

    # ---- average graph pooling: in-kernel (B, N) pool matrix @ feats ----
    col_i = jax.lax.broadcasted_iota(i32, (batch_size, N), 1)
    row_i = jax.lax.broadcasted_iota(i32, (batch_size, N), 0)
    pool = (jnp.logical_and(col_i >= row_i * n_nodes,
                            col_i < (row_i + 1) * n_nodes).astype(f32)
            * (1.0 / n_nodes))                                          # (B, N)
    graph_emb = jnp.dot(pool, feats, preferred_element_type=f32)        # (B, F_PAD)

    # ---- bulk lane-dense output assembly ----
    node_feats = feats.reshape(batch_size, n_nodes, f_pad)
    out_ref[...] = jnp.zeros(out_ref.shape, f32)                 # zeros pad rows
    out_ref[:, 0:n_nodes, 0:f_pad] = node_feats
    out_ref[:, :, f_pad:2 * f_pad] = jnp.broadcast_to(
        graph_emb[:, None, :], (batch_size, max_n_nodes, f_pad))


# ------------------------------ Forward pass ------------------------------- #

def gnn_dgl_forward(features, edges, param_slab, off, cfg):
    """Mirrors GnnDGL.forward for gin/avg/clique/residual/no-norm config."""
    batch_size = cfg["batch_size"]
    n_nodes = cfg["n_nodes"]
    max_n_nodes = cfg["max_n_nodes"]
    n_layers = cfg["n_layers"]
    hidden = cfg["hidden"]
    n_edge_types = cfg["n_edge_types"]

    in_dim = features.shape[1]
    num_nodes = features.shape[0]
    m_edges = edges.shape[1]
    fdim = in_dim + hidden * (n_layers + 1)
    f_pad = ((fdim + 127) // 128) * 128           # lane-dense feature width

    vmem = pl.BlockSpec(memory_space=pltpu.MemorySpace.VMEM)

    kernel = functools.partial(
        _gnn_fused_kernel,
        off=off, n_layers=n_layers, in_dim=in_dim, hidden=hidden,
        n_edge_types=n_edge_types, batch_size=batch_size,
        n_nodes=n_nodes, max_n_nodes=max_n_nodes, f_pad=f_pad)

    flops = 2 * (num_nodes * in_dim * hidden + num_nodes * hidden * hidden
                 + m_edges * n_edge_types * hidden
                 + n_layers * (2 * m_edges * num_nodes * hidden
                               + 2 * num_nodes * hidden * hidden)
                 + batch_size * num_nodes * f_pad)
    bytes_accessed = 4 * (features.size + edges.size + param_slab.size
                          + batch_size * max_n_nodes * 2 * f_pad)
    cost = pl.CostEstimate(flops=flops, transcendentals=0,
                           bytes_accessed=bytes_accessed)

    out_padded = pl.pallas_call(
        kernel,
        out_shape=jax.ShapeDtypeStruct(
            (batch_size, max_n_nodes, 2 * f_pad), jnp.float32),
        in_specs=[vmem, vmem, vmem],
        out_specs=vmem,
        scratch_shapes=[pltpu.VMEM((num_nodes, f_pad), jnp.float32)],
        cost_estimate=cost,
    )(features, edges, param_slab)

    # Slice back to the module's exact (B, max_n_nodes, 2*fdim) layout.
    # (Layout plumbing only; keep the 2*f_pad slab downstream if acceptable.)
    return jnp.concatenate(
        [out_padded[..., :fdim], out_padded[..., f_pad:f_pad + fdim]], axis=-1)


# --------------------------------- Driver ---------------------------------- #

if __name__ == "__main__":
    # config
    input_dim = 8
    hidden = 32
    n_layers = 2
    batch_size = 2
    n_nodes = 8                  # nodes per graph
    max_n_nodes = 12
    max_n_machines = 4
    num_nodes = batch_size * n_nodes
    n_edge_types = 5 + 1         # conflicts='clique', gconv_type='gin'
    features_dim = input_dim + hidden * (n_layers + 1)   # 104 (pre-doubling)

    key = jax.random.PRNGKey(0)
    ks = jax.random.split(key, 16)

    def init(k, shape, scale=0.1):
        return (scale * jax.random.normal(k, shape)).astype(jnp.float32)

    params = {
        # embedder MLP (input_dim -> hidden -> hidden)
        "emb_w0": init(ks[0], (input_dim, hidden)),
        "emb_b0": init(ks[1], (1, hidden)),
        "emb_w1": init(ks[2], (hidden, hidden)),
        "emb_b1": init(ks[3], (1, hidden)),
        # edge embedder: Embedding(5 + 1, hidden)
        "edge_table": init(ks[4], (n_edge_types, hidden)),
        # per-layer GINE apply_func MLPs (hidden -> hidden -> hidden), stacked
        "gine_w0": jnp.stack(
            [init(ks[6 + 2 * l], (hidden, hidden)) for l in range(n_layers)]),
        "gine_b0": jnp.stack(
            [init(ks[7 + 2 * l], (1, hidden)) for l in range(n_layers)]),
        "gine_w1": jnp.stack(
            [init(ks[10 + 2 * l], (hidden, hidden)) for l in range(n_layers)]),
        "gine_b1": jnp.stack(
            [init(ks[11 + 2 * l], (1, hidden)) for l in range(n_layers)]),
        # GINE learn_eps per layer
        "gine_eps": jnp.asarray([0.0 + 0.05 * l for l in range(n_layers)],
                                jnp.float32),
        # node_embedder (Embedding(1 + max_n_machines, input_dim)) is unused
        # with graph_pooling='avg' and conflicts='clique'; not packed.
    }

    # Pack parameters ONCE (init-time) into a single slab -> single DMA/call.
    param_slab, off = pack_params(params, n_layers, hidden)

    # deterministic synthetic batched JSSP-style graph (self-loops of type 0,
    # precedence fwd/bwd, a few clique conflict edges per graph)
    src, dst, typ = [], [], []
    for b in range(batch_size):
        base = b * n_nodes
        for i in range(n_nodes):                      # self loops, type 0
            src.append(base + i); dst.append(base + i); typ.append(0)
        for i in range(n_nodes - 1):                  # precedence fwd/bwd
            src.append(base + i); dst.append(base + i + 1); typ.append(1)
            src.append(base + i + 1); dst.append(base + i); typ.append(2)
        for (a, c) in [(0, 4), (4, 0), (2, 6), (6, 2)]:   # conflict clique edges
            src.append(base + a); dst.append(base + c); typ.append(5)
    edges = jnp.stack([jnp.asarray(typ, jnp.int32),
                       jnp.asarray(src, jnp.int32),
                       jnp.asarray(dst, jnp.int32)], axis=0)   # (3, M)

    features = init(jax.random.split(key, 1)[0], (num_nodes, input_dim), scale=1.0)

    cfg = dict(batch_size=batch_size, n_nodes=n_nodes, max_n_nodes=max_n_nodes,
               n_layers=n_layers, hidden=hidden, n_edge_types=n_edge_types)

    ret = gnn_dgl_forward(features, edges, param_slab, off, cfg)
    ret = jax.block_until_ready(ret)

    assert ret.shape == (batch_size, max_n_nodes, 2 * features_dim), ret.shape
    assert ret.dtype == jnp.float32
    assert bool(jnp.all(jnp.isfinite(ret)))
    print("KERNEL_OK")
</pallas_src>

<mosaic_0001>
module attributes {stable_mosaic.version = 11 : i64} {
  func.func @_gnn_fused_kernel(%arg0: memref<16x8xf32, #tpu.memory_space<vmem>>, %arg1: memref<3x52xi32, #tpu.memory_space<vmem>>, %arg2: memref<184x32xf32, #tpu.memory_space<vmem>>, %arg3: memref<2x12x256xf32, #tpu.memory_space<vmem>>, %arg4: memref<16x128xf32, #tpu.memory_space<vmem>>) attributes {dimension_semantics = [], scalar_prefetch = 0 : i64, scratch_operands = 1 : i64, tpu.core_type = #tpu.core_type<tc>} {
    %c0 = arith.constant 0 : index
    %c0_0 = arith.constant 0 : index
    %0 = vector.load %arg0[%c0, %c0_0] : memref<16x8xf32, #tpu.memory_space<vmem>>, vector<16x8xf32>
    %c0_1 = arith.constant 0 : index
    %c0_2 = arith.constant 0 : index
    %1 = vector.load %arg2[%c0_1, %c0_2] : memref<184x32xf32, #tpu.memory_space<vmem>>, vector<8x32xf32>
    %c8 = arith.constant 8 : index
    %c0_3 = arith.constant 0 : index
    %2 = vector.load %arg2[%c8, %c0_3] : memref<184x32xf32, #tpu.memory_space<vmem>>, vector<32x32xf32>
    %cst = arith.constant dense<0.000000e+00> : vector<16x32xf32>
    %3 = tpu.matmul %0, %1, %cst {dimension_numbers = #tpu.dot_dimension_numbers<[1], [0], [0], [1], [0, 0, 1, 1], [], []>} : vector<16x8xf32>, vector<8x32xf32>, vector<16x32xf32> -> vector<16x32xf32>
    %c176 = arith.constant 176 : index
    %c0_4 = arith.constant 0 : index
    %4 = vector.load %arg2[%c176, %c0_4] : memref<184x32xf32, #tpu.memory_space<vmem>>, vector<1x32xf32>
    %5 = vector.broadcast %4 : vector<1x32xf32> to vector<16x32xf32>
    %6 = arith.addf %3, %5 : vector<16x32xf32>
    %cst_5 = arith.constant 0.000000e+00 : f32
    %7 = vector.broadcast %cst_5 : f32 to vector<16x32xf32>
    %8 = arith.maximumf %6, %7 : vector<16x32xf32>
    %cst_6 = arith.constant dense<0.000000e+00> : vector<16x32xf32>
    %9 = tpu.matmul %8, %2, %cst_6 {dimension_numbers = #tpu.dot_dimension_numbers<[1], [0], [0], [1], [0, 0, 1, 1], [], []>} : vector<16x32xf32>, vector<32x32xf32>, vector<16x32xf32> -> vector<16x32xf32>
    %c177 = arith.constant 177 : index
    %c0_7 = arith.constant 0 : index
    %10 = vector.load %arg2[%c177, %c0_7] : memref<184x32xf32, #tpu.memory_space<vmem>>, vector<1x32xf32>
    %11 = vector.broadcast %10 : vector<1x32xf32> to vector<16x32xf32>
    %12 = arith.addf %9, %11 : vector<16x32xf32>
    %c0_8 = arith.constant 0 : index
    %c0_9 = arith.constant 0 : index
    %13 = vector.load %arg1[%c0_8, %c0_9] : memref<3x52xi32, #tpu.memory_space<vmem>>, vector<1x52xi32>
    %c1 = arith.constant 1 : index
    %c0_10 = arith.constant 0 : index
    %14 = vector.load %arg1[%c1, %c0_10] : memref<3x52xi32, #tpu.memory_space<vmem>>, vector<1x52xi32>
    %c2 = arith.constant 2 : index
    %c0_11 = arith.constant 0 : index
    %15 = vector.load %arg1[%c2, %c0_11] : memref<3x52xi32, #tpu.memory_space<vmem>>, vector<1x52xi32>
    %16 = tpu.iota {dimensions = array<i32: 0>} : vector<6x52xi32>
    %17 = vector.broadcast %13 : vector<1x52xi32> to vector<6x52xi32>
    %18 = arith.cmpi eq, %16, %17 : vector<6x52xi32>
    %19 = arith.extui %18 : vector<6x52xi1> to vector<6x52xi32>
    %20 = arith.sitofp %19 : vector<6x52xi32> to vector<6x52xf32>
    %c40 = arith.constant 40 : index
    %c0_12 = arith.constant 0 : index
    %21 = vector.load %arg2[%c40, %c0_12] : memref<184x32xf32, #tpu.memory_space<vmem>>, vector<6x32xf32>
    %cst_13 = arith.constant dense<0.000000e+00> : vector<52x32xf32>
    %22 = tpu.matmul %20, %21, %cst_13 {dimension_numbers = #tpu.dot_dimension_numbers<[0], [0], [1], [1], [0, 1, 1, 1], [], []>} : vector<6x52xf32>, vector<6x32xf32>, vector<52x32xf32> -> vector<52x32xf32>
    %23 = tpu.iota {dimensions = array<i32: 0>} : vector<16x52xi32>
    %24 = vector.broadcast %14 : vector<1x52xi32> to vector<16x52xi32>
    %25 = arith.cmpi eq, %23, %24 : vector<16x52xi32>
    %26 = arith.extui %25 : vector<16x52xi1> to vector<16x52xi32>
    %27 = arith.sitofp %26 : vector<16x52xi32> to vector<16x52xf32>
    %28 = tpu.iota {dimensions = array<i32: 0>} : vector<16x52xi32>
    %29 = vector.broadcast %15 : vector<1x52xi32> to vector<16x52xi32>
    %30 = arith.cmpi eq, %28, %29 : vector<16x52xi32>
    %31 = arith.extui %30 : vector<16x52xi1> to vector<16x52xi32>
    %32 = arith.sitofp %31 : vector<16x52xi32> to vector<16x52xf32>
    %cst_14 = arith.constant 0.000000e+00 : f32
    %33 = vector.broadcast %cst_14 : f32 to vector<16x128xf32>
    %c0_15 = arith.constant 0 : index
    %c0_16 = arith.constant 0 : index
    %34 = vector.load %arg4[%c0_15, %c0_16] : memref<16x128xf32, #tpu.memory_space<vmem>>, vector<16x128xf32>
    tpu.vector_store %arg4[%c0_15, %c0_16], %33 {strides = array<i32>} : memref<16x128xf32, #tpu.memory_space<vmem>>, vector<16x128xf32>,
    %c0_17 = arith.constant 0 : index
    %c0_18 = arith.constant 0 : index
    %35 = vector.load %arg4[%c0_17, %c0_18] : memref<16x128xf32, #tpu.memory_space<vmem>>, vector<16x8xf32>
    tpu.vector_store %arg4[%c0_17, %c0_18], %0 {strides = array<i32>} : memref<16x128xf32, #tpu.memory_space<vmem>>, vector<16x8xf32>,
    %c0_19 = arith.constant 0 : index
    %c8_20 = arith.constant 8 : index
    %36 = vector.load %arg4[%c0_19, %c8_20] : memref<16x128xf32, #tpu.memory_space<vmem>>, vector<16x32xf32>
    tpu.vector_store %arg4[%c0_19, %c8_20], %12 {strides = array<i32>} : memref<16x128xf32, #tpu.memory_space<vmem>>, vector<16x32xf32>,
    %c182 = arith.constant 182 : index
    %c0_21 = arith.constant 0 : index
    %37 = vector.load %arg2[%c182, %c0_21] : memref<184x32xf32, #tpu.memory_space<vmem>>, vector<1x1xf32>
    %cst_22 = arith.constant 1.000000e+00 : f32
    %38 = vector.broadcast %cst_22 : f32 to vector<1x1xf32>
    %39 = arith.addf %38, %37 : vector<1x1xf32>
    %cst_23 = arith.constant dense<0.000000e+00> : vector<52x32xf32>
    %40 = tpu.matmul %27, %12, %cst_23 {dimension_numbers = #tpu.dot_dimension_numbers<[0], [0], [1], [1], [0, 1, 1, 1], [], []>} : vector<16x52xf32>, vector<16x32xf32>, vector<52x32xf32> -> vector<52x32xf32>
    %41 = arith.addf %40, %22 : vector<52x32xf32>
    %cst_24 = arith.constant 0.000000e+00 : f32
    %42 = vector.broadcast %cst_24 : f32 to vector<52x32xf32>
    %43 = arith.maximumf %41, %42 : vector<52x32xf32>
    %cst_25 = arith.constant dense<0.000000e+00> : vector<16x32xf32>
    %44 = tpu.matmul %32, %43, %cst_25 {dimension_numbers = #tpu.dot_dimension_numbers<[1], [0], [0], [1], [0, 0, 1, 1], [], []>} : vector<16x52xf32>, vector<52x32xf32>, vector<16x32xf32> -> vector<16x32xf32>
    %45 = vector.broadcast %39 : vector<1x1xf32> to vector<16x32xf32>
    %46 = arith.mulf %12, %45 : vector<16x32xf32>
    %47 = arith.addf %46, %44 : vector<16x32xf32>
    %c48 = arith.constant 48 : index
    %c0_26 = arith.constant 0 : index
    %48 = vector.load %arg2[%c48, %c0_26] : memref<184x32xf32, #tpu.memory_space<vmem>>, vector<32x32xf32>
    %c112 = arith.constant 112 : index
    %c0_27 = arith.constant 0 : index
    %49 = vector.load %arg2[%c112, %c0_27] : memref<184x32xf32, #tpu.memory_space<vmem>>, vector<32x32xf32>
    %c178 = arith.constant 178 : index
    %c0_28 = arith.constant 0 : index
    %50 = vector.load %arg2[%c178, %c0_28] : memref<184x32xf32, #tpu.memory_space<vmem>>, vector<1x32xf32>
    %c180 = arith.constant 180 : index
    %c0_29 = arith.constant 0 : index
    %51 = vector.load %arg2[%c180, %c0_29] : memref<184x32xf32, #tpu.memory_space<vmem>>, vector<1x32xf32>
    %cst_30 = arith.constant dense<0.000000e+00> : vector<16x32xf32>
    %52 = tpu.matmul %47, %48, %cst_30 {dimension_numbers = #tpu.dot_dimension_numbers<[1], [0], [0], [1], [0, 0, 1, 1], [], []>} : vector<16x32xf32>, vector<32x32xf32>, vector<16x32xf32> -> vector<16x32xf32>
    %53 = vector.broadcast %50 : vector<1x32xf32> to vector<16x32xf32>
    %54 = arith.addf %52, %53 : vector<16x32xf32>
    %cst_31 = arith.constant 0.000000e+00 : f32
    %55 = vector.broadcast %cst_31 : f32 to vector<16x32xf32>
    %56 = arith.maximumf %54, %55 : vector<16x32xf32>
    %cst_32 = arith.constant dense<0.000000e+00> : vector<16x32xf32>
    %57 = tpu.matmul %56, %49, %cst_32 {dimension_numbers = #tpu.dot_dimension_numbers<[1], [0], [0], [1], [0, 0, 1, 1], [], []>} : vector<16x32xf32>, vector<32x32xf32>, vector<16x32xf32> -> vector<16x32xf32>
    %58 = vector.broadcast %51 : vector<1x32xf32> to vector<16x32xf32>
    %59 = arith.addf %57, %58 : vector<16x32xf32>
    %60 = arith.addf %59, %12 : vector<16x32xf32>
    %c0_33 = arith.constant 0 : index
    %c40_34 = arith.constant 40 : index
    %61 = vector.load %arg4[%c0_33, %c40_34] : memref<16x128xf32, #tpu.memory_space<vmem>>, vector<16x32xf32>
    tpu.vector_store %arg4[%c0_33, %c40_34], %60 {strides = array<i32>} : memref<16x128xf32, #tpu.memory_space<vmem>>, vector<16x32xf32>,
    %c182_35 = arith.constant 182 : index
    %c1_36 = arith.constant 1 : index
    %62 = vector.load %arg2[%c182_35, %c1_36] : memref<184x32xf32, #tpu.memory_space<vmem>>, vector<1x1xf32>
    %cst_37 = arith.constant 1.000000e+00 : f32
    %63 = vector.broadcast %cst_37 : f32 to vector<1x1xf32>
    %64 = arith.addf %63, %62 : vector<1x1xf32>
    %cst_38 = arith.constant dense<0.000000e+00> : vector<52x32xf32>
    %65 = tpu.matmul %27, %60, %cst_38 {dimension_numbers = #tpu.dot_dimension_numbers<[0], [0], [1], [1], [0, 1, 1, 1], [], []>} : vector<16x52xf32>, vector<16x32xf32>, vector<52x32xf32> -> vector<52x32xf32>
    %66 = arith.addf %65, %22 : vector<52x32xf32>
    %cst_39 = arith.constant 0.000000e+00 : f32
    %67 = vector.broadcast %cst_39 : f32 to vector<52x32xf32>
    %68 = arith.maximumf %66, %67 : vector<52x32xf32>
    %cst_40 = arith.constant dense<0.000000e+00> : vector<16x32xf32>
    %69 = tpu.matmul %32, %68, %cst_40 {dimension_numbers = #tpu.dot_dimension_numbers<[1], [0], [0], [1], [0, 0, 1, 1], [], []>} : vector<16x52xf32>, vector<52x32xf32>, vector<16x32xf32> -> vector<16x32xf32>
    %70 = vector.broadcast %64 : vector<1x1xf32> to vector<16x32xf32>
    %71 = arith.mulf %60, %70 : vector<16x32xf32>
    %72 = arith.addf %71, %69 : vector<16x32xf32>
    %c80 = arith.constant 80 : index
    %c0_41 = arith.constant 0 : index
    %73 = vector.load %arg2[%c80, %c0_41] : memref<184x32xf32, #tpu.memory_space<vmem>>, vector<32x32xf32>
    %c144 = arith.constant 144 : index
    %c0_42 = arith.constant 0 : index
    %74 = vector.load %arg2[%c144, %c0_42] : memref<184x32xf32, #tpu.memory_space<vmem>>, vector<32x32xf32>
    %c179 = arith.constant 179 : index
    %c0_43 = arith.constant 0 : index
    %75 = vector.load %arg2[%c179, %c0_43] : memref<184x32xf32, #tpu.memory_space<vmem>>, vector<1x32xf32>
    %c181 = arith.constant 181 : index
    %c0_44 = arith.constant 0 : index
    %76 = vector.load %arg2[%c181, %c0_44] : memref<184x32xf32, #tpu.memory_space<vmem>>, vector<1x32xf32>
    %cst_45 = arith.constant dense<0.000000e+00> : vector<16x32xf32>
    %77 = tpu.matmul %72, %73, %cst_45 {dimension_numbers = #tpu.dot_dimension_numbers<[1], [0], [0], [1], [0, 0, 1, 1], [], []>} : vector<16x32xf32>, vector<32x32xf32>, vector<16x32xf32> -> vector<16x32xf32>
    %78 = vector.broadcast %75 : vector<1x32xf32> to vector<16x32xf32>
    %79 = arith.addf %77, %78 : vector<16x32xf32>
    %cst_46 = arith.constant 0.000000e+00 : f32
    %80 = vector.broadcast %cst_46 : f32 to vector<16x32xf32>
    %81 = arith.maximumf %79, %80 : vector<16x32xf32>
    %cst_47 = arith.constant dense<0.000000e+00> : vector<16x32xf32>
    %82 = tpu.matmul %81, %74, %cst_47 {dimension_numbers = #tpu.dot_dimension_numbers<[1], [0], [0], [1], [0, 0, 1, 1], [], []>} : vector<16x32xf32>, vector<32x32xf32>, vector<16x32xf32> -> vector<16x32xf32>
    %83 = vector.broadcast %76 : vector<1x32xf32> to vector<16x32xf32>
    %84 = arith.addf %82, %83 : vector<16x32xf32>
    %85 = arith.addf %84, %60 : vector<16x32xf32>
    %c0_48 = arith.constant 0 : index
    %c72 = arith.constant 72 : index
    %86 = vector.load %arg4[%c0_48, %c72] : memref<16x128xf32, #tpu.memory_space<vmem>>, vector<16x32xf32>
    tpu.vector_store %arg4[%c0_48, %c72], %85 {strides = array<i32>} : memref<16x128xf32, #tpu.memory_space<vmem>>, vector<16x32xf32>,
    %c0_49 = arith.constant 0 : index
    %c0_50 = arith.constant 0 : index
    %87 = vector.load %arg4[%c0_49, %c0_50] : memref<16x128xf32, #tpu.memory_space<vmem>>, vector<16x128xf32>
    %88 = tpu.iota {dimensions = array<i32: 1>} : vector<2x16xi32>
    %89 = tpu.iota {dimensions = array<i32: 0>} : vector<2x16xi32>
    %c8_i32 = arith.constant 8 : i32
    %90 = vector.broadcast %c8_i32 : i32 to vector<2x16xi32>
    %91 = arith.muli %89, %90 : vector<2x16xi32>
    %92 = arith.cmpi sge, %88, %91 : vector<2x16xi32>
    %c1_i32 = arith.constant 1 : i32
    %93 = vector.broadcast %c1_i32 : i32 to vector<2x16xi32>
    %94 = arith.addi %89, %93 : vector<2x16xi32>
    %c8_i32_51 = arith.constant 8 : i32
    %95 = vector.broadcast %c8_i32_51 : i32 to vector<2x16xi32>
    %96 = arith.muli %94, %95 : vector<2x16xi32>
    %97 = arith.cmpi slt, %88, %96 : vector<2x16xi32>
    %98 = arith.andi %92, %97 : vector<2x16xi1>
    %99 = arith.extui %98 : vector<2x16xi1> to vector<2x16xi32>
    %100 = arith.sitofp %99 : vector<2x16xi32> to vector<2x16xf32>
    %cst_52 = arith.constant 1.250000e-01 : f32
    %101 = vector.broadcast %cst_52 : f32 to vector<2x16xf32>
    %102 = arith.mulf %100, %101 : vector<2x16xf32>
    %cst_53 = arith.constant dense<0.000000e+00> : vector<2x128xf32>
    %103 = tpu.matmul %102, %87, %cst_53 {dimension_numbers = #tpu.dot_dimension_numbers<[1], [0], [0], [1], [0, 0, 1, 1], [], []>} : vector<2x16xf32>, vector<16x128xf32>, vector<2x128xf32> -> vector<2x128xf32>
    %104 = vector.shape_cast %87 : vector<16x128xf32> to vector<2x8x128xf32>
    %cst_54 = arith.constant 0.000000e+00 : f32
    %105 = vector.broadcast %cst_54 : f32 to vector<2x12x256xf32>
    %c0_55 = arith.constant 0 : index
    %c0_56 = arith.constant 0 : index
    %c0_57 = arith.constant 0 : index
    %106 = vector.load %arg3[%c0_55, %c0_56, %c0_57] : memref<2x12x256xf32, #tpu.memory_space<vmem>>, vector<2x12x256xf32>
    tpu.vector_store %arg3[%c0_55, %c0_56, %c0_57], %105 {strides = array<i32>} : memref<2x12x256xf32, #tpu.memory_space<vmem>>, vector<2x12x256xf32>,
    %c0_58 = arith.constant 0 : index
    %c0_59 = arith.constant 0 : index
    %c0_60 = arith.constant 0 : index
    %107 = vector.load %arg3[%c0_58, %c0_59, %c0_60] : memref<2x12x256xf32, #tpu.memory_space<vmem>>, vector<2x8x128xf32>
    tpu.vector_store %arg3[%c0_58, %c0_59, %c0_60], %104 {strides = array<i32>} : memref<2x12x256xf32, #tpu.memory_space<vmem>>, vector<2x8x128xf32>,
    %108 = vector.shape_cast %103 : vector<2x128xf32> to vector<2x1x128xf32>
    %109 = vector.shape_cast %108 : vector<2x1x128xf32> to vector<2x1x128xf32>
    %110 = vector.broadcast %109 : vector<2x1x128xf32> to vector<2x12x128xf32>
    %c0_61 = arith.constant 0 : index
    %c0_62 = arith.constant 0 : index
    %c128 = arith.constant 128 : index
    %111 = vector.load %arg3[%c0_61, %c0_62, %c128] : memref<2x12x256xf32, #tpu.memory_space<vmem>>, vector<2x12x128xf32>
    tpu.vector_store %arg3[%c0_61, %c0_62, %c128], %110 {strides = array<i32>} : memref<2x12x256xf32, #tpu.memory_space<vmem>>, vector<2x12x128xf32>,
    return
  }
}

</mosaic_0001>

<llo_original>
// kernel: tpu_custom_call.1
$region0: #{tpu_custom_call.1}
  #allocation0 [shape = 'u32[]', space=smem, size = 0x4, offset = 0x4, fixed_abs, tag = 'smem constant byte address 0x4 - core index']
  #allocation1 [shape = 'u32[144,128]{1,0:T(1,128)}', space=vmem, size = 0x12000, scoped, tag = 'internal scratch']
  #allocation2 [shape = 'f32[16,128]{1,0:T(8,128)}', space=vmem, size = 0x2000, scoped, tag = 'scratch operand']
  %s0 = inlined_call_operand.vmem [shape: f32[16,8], index: 0, kind: input, shape index: {}]
  %s1 = inlined_call_operand.vmem [shape: s32[3,52], index: 1, kind: input, shape index: {}]
  %s2 = inlined_call_operand.vmem [shape: f32[184,32], index: 2, kind: input, shape index: {}]
  %s3 = inlined_call_operand.vmem [shape: f32[2,12,256], index: 3, kind: output, shape index: {}]
  %s4 = sld [smem:[#allocation0]]
  $region22: #{tpu_custom_call.1} parent=0
    _
  %s6 = ssub.s32 1, %s4
  %s7 = scalar_select 0, %s6, %s4
  // Predicated region
  $region2: #{tpu_custom_call.1} parent=0 // pred_check
    _
  $region3: #{tpu_custom_call.1} parent=0 // pred_check_branch
    %9 = sbr.rel (0) target = $region5
  $region4: #{tpu_custom_call.1} parent=0 // pred_region
    _
  $region5: #{tpu_custom_call.1} parent=0 // pred_fallthru
    _
  // Predicated region
  $region6: #{tpu_custom_call.1} parent=0 // pred_check
    _
  $region7: #{tpu_custom_call.1} parent=0 // pred_check_branch
    %11 = sbr.rel (0) target = $region9
  $region8: #{tpu_custom_call.1} parent=0 // pred_region
    _
  $region9: #{tpu_custom_call.1} parent=0 // pred_fallthru
    _
  // Predicated region
  $region10: #{tpu_custom_call.1} parent=0 // pred_check
    _
  $region11: #{tpu_custom_call.1} parent=0 // pred_check_branch
    %13 = sbr.rel (0) target = $region13
  $region12: #{tpu_custom_call.1} parent=0 // pred_region
    _
  $region13: #{tpu_custom_call.1} parent=0 // pred_fallthru
    _
  %v14 = vld [vmem:[%s0] sm:$0xff]
  %v15 = vld [vmem:[%s0 + $0x8] sm:$0xff]
  %v16 = vld [vmem:[%s2] sm:$0xff]
  %v17 = vld [vmem:[%s2 + $0x8] sm:$0xff]
  %v18 = vld [vmem:[%s2 + $0x10] sm:$0xff]
  %v19 = vld [vmem:[%s2 + $0x18] sm:$0xff]
  %v20 = vld [vmem:[%s2 + $0x20] sm:$0xff]
  %v21 = vld [vmem:[%s2 + $0xb0] sm:$0x1]
  %v22 = vlaneseq
  %v23 = vshrl.u32 %v22, 7
  %v24 = vsub.s32 0, %v23
  %v25 = vrot.slane %v21, %v24
  %vm26 = vcmask 64512
  %v28 = vsel %vm26, %v14, 0
  %v31 = vsel %vm26, %v15, 0
  %33 = vmatprep.subr.mxu0 0.0
  %34 = vmatpush1.msra.mxu0 %v16
  %35 = vmatprep.subr.mxu0 0.0
  %36 = vmatpush1.msra.mxu0 0.0
  %37 = vmatprep.subr.mxu0 0.0
  %38 = vmatpush1.msra.mxu0 0.0
  %39 = vmatprep.subr.mxu0 0.0
  %40 = vmatpush1.msra.mxu0 0.0
  %41 = vmatprep.subr.mxu0 0.0
  %42 = vmatpush1.msra.mxu0 0.0
  %43 = vmatprep.subr.mxu0 0.0
  %44 = vmatpush1.msra.mxu0 0.0
  %45 = vmatprep.subr.mxu0 0.0
  %46 = vmatpush1.msra.mxu0 0.0
  %47 = vmatprep.subr.mxu0 0.0
  %48 = vmatpush1.msra.mxu0 0.0
  %49 = vmatprep.subr.mxu0 0.0
  %50 = vmatpush1.msra.mxu0 0.0
  %51 = vmatprep.subr.mxu0 0.0
  %52 = vmatpush1.msra.mxu0 0.0
  %53 = vmatprep.subr.mxu0 0.0
  %54 = vmatpush1.msra.mxu0 0.0
  %55 = vmatprep.subr.mxu0 0.0
  %56 = vmatpush1.msra.mxu0 0.0
  %57 = vmatprep.subr.mxu0 0.0
  %58 = vmatpush1.msra.mxu0 0.0
  %59 = vmatprep.subr.mxu0 0.0
  %60 = vmatpush1.msra.mxu0 0.0
  %61 = vmatprep.subr.mxu0 0.0
  %62 = vmatpush1.msra.mxu0 0.0
  %63 = vmatprep.subr.mxu0 0.0
  %64 = vmatpush1.msra.mxu0 0.0
  %65 = vmatprep.subr.mxu0 0.0
  %66 = vmatpush1.msra.mxu0 0.0
  %67 = vmatprep.subr.mxu0 0.0
  %68 = vmatpush1.msra.mxu0 0.0
  %69 = vmatprep.subr.mxu0 0.0
  %70 = vmatpush1.msra.mxu0 0.0
  %71 = vmatprep.subr.mxu0 0.0
  %72 = vmatpush1.msra.mxu0 0.0
  %73 = vmatprep.subr.mxu0 0.0
  %74 = vmatpush1.msra.mxu0 0.0
  %75 = vmatprep.subr.mxu0 0.0
  %76 = vmatpush1.msra.mxu0 0.0
  %77 = vmatprep.subr.mxu0 0.0
  %78 = vmatpush1.msra.mxu0 0.0
  %79 = vmatprep.subr.mxu0 0.0
  %80 = vmatpush1.msra.mxu0 0.0
  %81 = vmatprep.subr.mxu0 0.0
  %82 = vmatpush1.msra.mxu0 0.0
  %83 = vmatprep.subr.mxu0 0.0
  %84 = vmatpush1.msra.mxu0 0.0
  %85 = vmatprep.subr.mxu0 0.0
  %86 = vmatpush1.msra.mxu0 0.0
  %87 = vmatprep.subr.mxu0 0.0
  %88 = vmatpush1.msra.mxu0 0.0
  %89 = vmatprep.subr.mxu0 0.0
  %90 = vmatpush1.msra.mxu0 0.0
  %91 = vmatprep.subr.mxu0 0.0
  %92 = vmatpush1.msra.mxu0 0.0
  %93 = vmatprep.subr.mxu0 0.0
  %94 = vmatpush1.msra.mxu0 0.0
  %95 = vmatprep.subr.mxu0 0.0
  %96 = vmatpush1.msra.mxu0 0.0
  %97 = vmatprep.mubr.f32.mxu0 0.0
  %98 = vmatmul.mubr.f32.gmra.mrb[0].mxu0 %v28
  %v99 = vpop.f32.mrb[0].mxu0
  %v100 = vadd.f32 %v25, %v99
  %v101 = vpop.f32.mrb[0].mxu0
  %102 = vmatprep.mubr.f32.mxu0 0.0
  %103 = vmatmul.mubr.f32.gmra.mrb[0].mxu0 %v31
  %v104 = vpop.f32.mrb[0].mxu0
  %v105 = vadd.f32 %v25, %v104
  %v106 = vpop.f32.mrb[0].mxu0
  %107 = vdwg.mxu0
  %v108 = vmax.f32 %v100, 0.0
  %v109 = vmax.f32 %v105, 0.0
  %v110 = vld [vmem:[%s2 + $0xb1] sm:$0x1]
  %v111 = vlaneseq
  %v112 = vshrl.u32 %v111, 7
  %v113 = vsub.s32 0, %v112
  %v114 = vrot.slane %v110, %v113
  %vm115 = vcmask 261120
  %v117 = vsel %vm115, %v108, 0
  %v120 = vsel %vm115, %v109, 0
  %122 = vmatprep.subr.mxu0 0.0
  %123 = vmatpush1.msra.mxu0 %v17
  %124 = vmatprep.subr.mxu0 0.0
  %125 = vmatpush1.msra.mxu0 %v18
  %126 = vmatprep.subr.mxu0 0.0
  %127 = vmatpush1.msra.mxu0 %v19
  %128 = vmatprep.subr.mxu0 0.0
  %129 = vmatpush1.msra.mxu0 %v20
  %130 = vmatprep.subr.mxu0 0.0
  %131 = vmatpush1.msra.mxu0 0.0
  %132 = vmatprep.subr.mxu0 0.0
  %133 = vmatpush1.msra.mxu0 0.0
  %134 = vmatprep.subr.mxu0 0.0
  %135 = vmatpush1.msra.mxu0 0.0
  %136 = vmatprep.subr.mxu0 0.0
  %137 = vmatpush1.msra.mxu0 0.0
  %138 = vmatprep.subr.mxu0 0.0
  %139 = vmatpush1.msra.mxu0 0.0
  %140 = vmatprep.subr.mxu0 0.0
  %141 = vmatpush1.msra.mxu0 0.0
  %142 = vmatprep.subr.mxu0 0.0
  %143 = vmatpush1.msra.mxu0 0.0
  %144 = vmatprep.subr.mxu0 0.0
  %145 = vmatpush1.msra.mxu0 0.0
  %146 = vmatprep.subr.mxu0 0.0
  %147 = vmatpush1.msra.mxu0 0.0
  %148 = vmatprep.subr.mxu0 0.0
  %149 = vmatpush1.msra.mxu0 0.0
  %150 = vmatprep.subr.mxu0 0.0
  %151 = vmatpush1.msra.mxu0 0.0
  %152 = vmatprep.subr.mxu0 0.0
  %153 = vmatpush1.msra.mxu0 0.0
  %154 = vmatprep.subr.mxu0 0.0
  %155 = vmatpush1.msra.mxu0 0.0
  %156 = vmatprep.subr.mxu0 0.0
  %157 = vmatpush1.msra.mxu0 0.0
  %158 = vmatprep.subr.mxu0 0.0
  %159 = vmatpush1.msra.mxu0 0.0
  %160 = vmatprep.subr.mxu0 0.0
  %161 = vmatpush1.msra.mxu0 0.0
  %162 = vmatprep.subr.mxu0 0.0
  %163 = vmatpush1.msra.mxu0 0.0
  %164 = vmatprep.subr.mxu0 0.0
  %165 = vmatpush1.msra.mxu0 0.0
  %166 = vmatprep.subr.mxu0 0.0
  %167 = vmatpush1.msra.mxu0 0.0
  %168 = vmatprep.subr.mxu0 0.0
  %169 = vmatpush1.msra.mxu0 0.0
  %170 = vmatprep.subr.mxu0 0.0
  %171 = vmatpush1.msra.mxu0 0.0
  %172 = vmatprep.subr.mxu0 0.0
  %173 = vmatpush1.msra.mxu0 0.0
  %174 = vmatprep.subr.mxu0 0.0
  %175 = vmatpush1.msra.mxu0 0.0
  %176 = vmatprep.subr.mxu0 0.0
  %177 = vmatpush1.msra.mxu0 0.0
  %178 = vmatprep.subr.mxu0 0.0
  %179 = vmatpush1.msra.mxu0 0.0
  %180 = vmatprep.subr.mxu0 0.0
  %181 = vmatpush1.msra.mxu0 0.0
  %182 = vmatprep.subr.mxu0 0.0
  %183 = vmatpush1.msra.mxu0 0.0
  %184 = vmatprep.subr.mxu0 0.0
  %185 = vmatpush1.msra.mxu0 0.0
  %186 = vmatprep.mubr.f32.mxu0 0.0
  %187 = vmatmul.mubr.f32.gmra.mrb[0].mxu0 %v117
  %v188 = vpop.f32.mrb[0].mxu0
  %v189 = vadd.f32 %v114, %v188
  %v190 = vpop.f32.mrb[0].mxu0
  %191 = vmatprep.mubr.f32.mxu0 0.0
  %192 = vmatmul.mubr.f32.gmra.mrb[0].mxu0 %v120
  %v193 = vpop.f32.mrb[0].mxu0
  %v194 = vadd.f32 %v114, %v193
  %v195 = vpop.f32.mrb[0].mxu0
  %196 = vdwg.mxu0
  %v197 = vld [vmem:[%s1] sm:$0x1]
  %v198 = vld [vmem:[%s1 + $0x1] sm:$0x1]
  %v199 = vld [vmem:[%s1 + $0x2] sm:$0x1]
  %v200 = vlaneseq
  %v201 = vshrl.u32 %v200, 7
  %v202 = vlaneseq
  %v203 = vshrl.u32 %v202, 7
  %v204 = vsub.s32 0, %v203
  %v205 = vrot.slane %v197, %v204
  %vm206 = vcmp.eq.s32.totalorder %v201, %v205
  %v207 = vsel %vm206, 1, 0
  %v208 = vcvt.s32.f32 %v207
  %v209 = vld [vmem:[%s2 + $0x28] sm:$0x3f]
  %210 = vxpose.xlu0.b32.start [1/16] %v208, 128
  %211 = vxpose.xlu0.b32.cont [2/16] 0.0, 128
  %212 = vxpose.xlu0.b32.cont [3/16] 0.0, 128
  %213 = vxpose.xlu0.b32.cont [4/16] 0.0, 128
  %214 = vxpose.xlu0.b32.cont [5/16] 0.0, 128
  %215 = vxpose.xlu0.b32.cont [6/16] 0.0, 128
  %216 = vxpose.xlu0.b32.cont [7/16] 0.0, 128
  %217 = vxpose.xlu0.b32.cont [8/16] 0.0, 128
  %218 = vxpose.xlu0.b32.cont [9/16] 0.0, 128
  %219 = vxpose.xlu0.b32.cont [10/16] 0.0, 128
  %220 = vxpose.xlu0.b32.cont [11/16] 0.0, 128
  %221 = vxpose.xlu0.b32.cont [12/16] 0.0, 128
  %222 = vxpose.xlu0.b32.cont [13/16] 0.0, 128
  %223 = vxpose.xlu0.b32.cont [14/16] 0.0, 128
  %224 = vxpose.xlu0.b32.cont [15/16] 0.0, 128
  %225 = vxpose.xlu0.b32.end [16/16] 0.0, 128
  %v226 = vpop.trf.xlu0
  %v227 = vpop.trf.xlu0
  %v228 = vpop.trf.xlu0
  %v229 = vpop.trf.xlu0
  %v230 = vpop.trf.xlu0
  %v231 = vpop.trf.xlu0
  %v232 = vpop.trf.xlu0
  %v233 = vpop.trf.xlu0
  %v234 = vpop.trf.xlu0
  %v235 = vpop.trf.xlu0
  %v236 = vpop.trf.xlu0
  %v237 = vpop.trf.xlu0
  %v238 = vpop.trf.xlu0
  %v239 = vpop.trf.xlu0
  %v240 = vpop.trf.xlu0
  %v241 = vpop.trf.xlu0
  %vm242 = vcmask 48128
  %v244 = vsel %vm242, %v226, 0
  %v247 = vsel %vm242, %v227, 0
  %v250 = vsel %vm242, %v228, 0
  %v253 = vsel %vm242, %v229, 0
  %v256 = vsel %vm242, %v230, 0
  %v259 = vsel %vm242, %v231, 0
  %v262 = vsel %vm242, %v232, 0
  %vm264 = vcmask 1045504
  %v266 = vsel %vm264, %v209, 0
  %268 = vmatprep.subr.mxu0 0.0
  %269 = vmatpush1.msra.mxu0 %v266
  %270 = vmatprep.subr.mxu0 0.0
  %271 = vmatpush1.msra.mxu0 0.0
  %272 = vmatprep.subr.mxu0 0.0
  %273 = vmatpush1.msra.mxu0 0.0
  %274 = vmatprep.subr.mxu0 0.0
  %275 = vmatpush1.msra.mxu0 0.0
  %276 = vmatprep.subr.mxu0 0.0
  %277 = vmatpush1.msra.mxu0 0.0
  %278 = vmatprep.subr.mxu0 0.0
  %279 = vmatpush1.msra.mxu0 0.0
  %280 = vmatprep.subr.mxu0 0.0
  %281 = vmatpush1.msra.mxu0 0.0
  %282 = vmatprep.subr.mxu0 0.0
  %283 = vmatpush1.msra.mxu0 0.0
  %284 = vmatprep.subr.mxu0 0.0
  %285 = vmatpush1.msra.mxu0 0.0
  %286 = vmatprep.subr.mxu0 0.0
  %287 = vmatpush1.msra.mxu0 0.0
  %288 = vmatprep.subr.mxu0 0.0
  %289 = vmatpush1.msra.mxu0 0.0
  %290 = vmatprep.subr.mxu0 0.0
  %291 = vmatpush1.msra.mxu0 0.0
  %292 = vmatprep.subr.mxu0 0.0
  %293 = vmatpush1.msra.mxu0 0.0
  %294 = vmatprep.subr.mxu0 0.0
  %295 = vmatpush1.msra.mxu0 0.0
  %296 = vmatprep.subr.mxu0 0.0
  %297 = vmatpush1.msra.mxu0 0.0
  %298 = vmatprep.subr.mxu0 0.0
  %299 = vmatpush1.msra.mxu0 0.0
  %300 = vmatprep.subr.mxu0 0.0
  %301 = vmatpush1.msra.mxu0 0.0
  %302 = vmatprep.subr.mxu0 0.0
  %303 = vmatpush1.msra.mxu0 0.0
  %304 = vmatprep.subr.mxu0 0.0
  %305 = vmatpush1.msra.mxu0 0.0
  %306 = vmatprep.subr.mxu0 0.0
  %307 = vmatpush1.msra.mxu0 0.0
  %308 = vmatprep.subr.mxu0 0.0
  %309 = vmatpush1.msra.mxu0 0.0
  %310 = vmatprep.subr.mxu0 0.0
  %311 = vmatpush1.msra.mxu0 0.0
  %312 = vmatprep.subr.mxu0 0.0
  %313 = vmatpush1.msra.mxu0 0.0
  %314 = vmatprep.subr.mxu0 0.0
  %315 = vmatpush1.msra.mxu0 0.0
  %316 = vmatprep.subr.mxu0 0.0
  %317 = vmatpush1.msra.mxu0 0.0
  %318 = vmatprep.subr.mxu0 0.0
  %319 = vmatpush1.msra.mxu0 0.0
  %320 = vmatprep.subr.mxu0 0.0
  %321 = vmatpush1.msra.mxu0 0.0
  %322 = vmatprep.subr.mxu0 0.0
  %323 = vmatpush1.msra.mxu0 0.0
  %324 = vmatprep.subr.mxu0 0.0
  %325 = vmatpush1.msra.mxu0 0.0
  %326 = vmatprep.subr.mxu0 0.0
  %327 = vmatpush1.msra.mxu0 0.0
  %328 = vmatprep.subr.mxu0 0.0
  %329 = vmatpush1.msra.mxu0 0.0
  %330 = vmatprep.subr.mxu0 0.0
  %331 = vmatpush1.msra.mxu0 0.0
  %332 = vmatprep.mubr.f32.mxu0 0.0
  %333 = vmatmul.mubr.f32.gmra.mrb[0].mxu0 %v244
  %v334 = vpop.f32.mrb[0].mxu0
  %v335 = vadd.f32 0.0, %v334
  %v336 = vpop.f32.mrb[0].mxu0
  %337 = vmatprep.mubr.f32.mxu0 0.0
  %338 = vmatmul.mubr.f32.gmra.mrb[0].mxu0 %v247
  %v339 = vpop.f32.mrb[0].mxu0
  %v340 = vadd.f32 0.0, %v339
  %v341 = vpop.f32.mrb[0].mxu0
  %342 = vmatprep.mubr.f32.mxu0 0.0
  %343 = vmatmul.mubr.f32.gmra.mrb[0].mxu0 %v250
  %v344 = vpop.f32.mrb[0].mxu0
  %v345 = vadd.f32 0.0, %v344
  %v346 = vpop.f32.mrb[0].mxu0
  %347 = vmatprep.mubr.f32.mxu0 0.0
  %348 = vmatmul.mubr.f32.gmra.mrb[0].mxu0 %v253
  %v349 = vpop.f32.mrb[0].mxu0
  %v350 = vadd.f32 0.0, %v349
  %v351 = vpop.f32.mrb[0].mxu0
  %352 = vmatprep.mubr.f32.mxu0 0.0
  %353 = vmatmul.mubr.f32.gmra.mrb[0].mxu0 %v256
  %v354 = vpop.f32.mrb[0].mxu0
  %v355 = vadd.f32 0.0, %v354
  %v356 = vpop.f32.mrb[0].mxu0
  %357 = vmatprep.mubr.f32.mxu0 0.0
  %358 = vmatmul.mubr.f32.gmra.mrb[0].mxu0 %v259
  %v359 = vpop.f32.mrb[0].mxu0
  %v360 = vadd.f32 0.0, %v359
  %v361 = vpop.f32.mrb[0].mxu0
  %362 = vmatprep.mubr.f32.mxu0 0.0
  %363 = vmatmul.mubr.f32.gmra.mrb[0].mxu0 %v262
  %v364 = vpop.f32.mrb[0].mxu0
  %v365 = vadd.f32 0.0, %v364
  %v366 = vpop.f32.mrb[0].mxu0
  %367 = vdwg.mxu0
  %v368 = vadd.s32 %v201, 8
  %v369 = vlaneseq
  %v370 = vshrl.u32 %v369, 7
  %v371 = vsub.s32 0, %v370
  %v372 = vrot.slane %v198, %v371
  %vm373 = vcmp.eq.s32.totalorder %v201, %v372
  %vm374 = vcmp.eq.s32.totalorder %v368, %v372
  %v375 = vsel %vm373, 1, 0
  %v376 = vsel %vm374, 1, 0
  %v377 = vcvt.s32.f32 %v375
  %v378 = vcvt.s32.f32 %v376
  %v379 = vlaneseq
  %v380 = vshrl.u32 %v379, 7
  %v381 = vsub.s32 0, %v380
  %v382 = vrot.slane %v199, %v381
  %vm383 = vcmp.eq.s32.totalorder %v201, %v382
  %vm384 = vcmp.eq.s32.totalorder %v368, %v382
  %v385 = vsel %vm383, 1, 0
  %v386 = vsel %vm384, 1, 0
  %v387 = vcvt.s32.f32 %v385
  %v388 = vcvt.s32.f32 %v386
  %389 = vst [vmem:[#allocation2] sm:$0xff] 0.0
  %390 = vst [vmem:[#allocation2 + $0x8] sm:$0xff] 0.0
  %391 = vst.msk [vmem:[#allocation2] sm:$0xff] %vm26, %v14
  %392 = vst.msk [vmem:[#allocation2 + $0x8] sm:$0xff] %vm26, %v15
  %395 = vrot.lane.b32.xlu0 %v189, 8
  %v396 = vpop.permute.xlu0 %395
  %397 = vrot.lane.b32.xlu0 %v194, 8
  %v398 = vpop.permute.xlu0 %397
  %vm401 = vcmask 326720
  %402 = vst.msk [vmem:[#allocation2] sm:$0xff] %vm401, %v396
  %403 = vst.msk [vmem:[#allocation2 + $0x8] sm:$0xff] %vm401, %v398
  %v404 = vld [vmem:[%s2 + $0xb6] sm:$0x1]
  %v405 = vadd.f32 %v404, 1.0
  %406 = vxpose.xlu0.b32.start [1/16] %v377, 128
  %407 = vxpose.xlu0.b32.cont [2/16] %v378, 128
  %408 = vxpose.xlu0.b32.cont [3/16] 0.0, 128
  %409 = vxpose.xlu0.b32.cont [4/16] 0.0, 128
  %410 = vxpose.xlu0.b32.cont [5/16] 0.0, 128
  %411 = vxpose.xlu0.b32.cont [6/16] 0.0, 128
  %412 = vxpose.xlu0.b32.cont [7/16] 0.0, 128
  %413 = vxpose.xlu0.b32.cont [8/16] 0.0, 128
  %414 = vxpose.xlu0.b32.cont [9/16] 0.0, 128
  %415 = vxpose.xlu0.b32.cont [10/16] 0.0, 128
  %416 = vxpose.xlu0.b32.cont [11/16] 0.0, 128
  %417 = vxpose.xlu0.b32.cont [12/16] 0.0, 128
  %418 = vxpose.xlu0.b32.cont [13/16] 0.0, 128
  %419 = vxpose.xlu0.b32.cont [14/16] 0.0, 128
  %420 = vxpose.xlu0.b32.cont [15/16] 0.0, 128
  %421 = vxpose.xlu0.b32.end [16/16] 0.0, 128
  %v422 = vpop.trf.xlu0
  %v423 = vpop.trf.xlu0
  %v424 = vpop.trf.xlu0
  %v425 = vpop.trf.xlu0
  %v426 = vpop.trf.xlu0
  %v427 = vpop.trf.xlu0
  %v428 = vpop.trf.xlu0
  %v429 = vpop.trf.xlu0
  %v430 = vpop.trf.xlu0
  %v431 = vpop.trf.xlu0
  %v432 = vpop.trf.xlu0
  %v433 = vpop.trf.xlu0
  %v434 = vpop.trf.xlu0
  %v435 = vpop.trf.xlu0
  %v436 = vpop.trf.xlu0
  %v437 = vpop.trf.xlu0
  %vm438 = vcmask 130048
  %v440 = vsel %vm438, %v422, 0
  %v443 = vsel %vm438, %v423, 0
  %v446 = vsel %vm438, %v424, 0
  %v449 = vsel %vm438, %v425, 0
  %v452 = vsel %vm438, %v426, 0
  %v455 = vsel %vm438, %v427, 0
  %v458 = vsel %vm438, %v428, 0
  %460 = vmatprep.subr.mxu0 0.0
  %461 = vmatpush1.msra.mxu0 %v189
  %462 = vmatprep.subr.mxu0 0.0
  %463 = vmatpush1.msra.mxu0 %v194
  %464 = vmatprep.subr.mxu0 0.0
  %465 = vmatpush1.msra.mxu0 0.0
  %466 = vmatprep.subr.mxu0 0.0
  %467 = vmatpush1.msra.mxu0 0.0
  %468 = vmatprep.subr.mxu0 0.0
  %469 = vmatpush1.msra.mxu0 0.0
  %470 = vmatprep.subr.mxu0 0.0
  %471 = vmatpush1.msra.mxu0 0.0
  %472 = vmatprep.subr.mxu0 0.0
  %473 = vmatpush1.msra.mxu0 0.0
  %474 = vmatprep.subr.mxu0 0.0
  %475 = vmatpush1.msra.mxu0 0.0
  %476 = vmatprep.subr.mxu0 0.0
  %477 = vmatpush1.msra.mxu0 0.0
  %478 = vmatprep.subr.mxu0 0.0
  %479 = vmatpush1.msra.mxu0 0.0
  %480 = vmatprep.subr.mxu0 0.0
  %481 = vmatpush1.msra.mxu0 0.0
  %482 = vmatprep.subr.mxu0 0.0
  %483 = vmatpush1.msra.mxu0 0.0
  %484 = vmatprep.subr.mxu0 0.0
  %485 = vmatpush1.msra.mxu0 0.0
  %486 = vmatprep.subr.mxu0 0.0
  %487 = vmatpush1.msra.mxu0 0.0
  %488 = vmatprep.subr.mxu0 0.0
  %489 = vmatpush1.msra.mxu0 0.0
  %490 = vmatprep.subr.mxu0 0.0
  %491 = vmatpush1.msra.mxu0 0.0
  %492 = vmatprep.subr.mxu0 0.0
  %493 = vmatpush1.msra.mxu0 0.0
  %494 = vmatprep.subr.mxu0 0.0
  %495 = vmatpush1.msra.mxu0 0.0
  %496 = vmatprep.subr.mxu0 0.0
  %497 = vmatpush1.msra.mxu0 0.0
  %498 = vmatprep.subr.mxu0 0.0
  %499 = vmatpush1.msra.mxu0 0.0
  %500 = vmatprep.subr.mxu0 0.0
  %501 = vmatpush1.msra.mxu0 0.0
  %502 = vmatprep.subr.mxu0 0.0
  %503 = vmatpush1.msra.mxu0 0.0
  %504 = vmatprep.subr.mxu0 0.0
  %505 = vmatpush1.msra.mxu0 0.0
  %506 = vmatprep.subr.mxu0 0.0
  %507 = vmatpush1.msra.mxu0 0.0
  %508 = vmatprep.subr.mxu0 0.0
  %509 = vmatpush1.msra.mxu0 0.0
  %510 = vmatprep.subr.mxu0 0.0
  %511 = vmatpush1.msra.mxu0 0.0
  %512 = vmatprep.subr.mxu0 0.0
  %513 = vmatpush1.msra.mxu0 0.0
  %514 = vmatprep.subr.mxu0 0.0
  %515 = vmatpush1.msra.mxu0 0.0
  %516 = vmatprep.subr.mxu0 0.0
  %517 = vmatpush1.msra.mxu0 0.0
  %518 = vmatprep.subr.mxu0 0.0
  %519 = vmatpush1.msra.mxu0 0.0
  %520 = vmatprep.subr.mxu0 0.0
  %521 = vmatpush1.msra.mxu0 0.0
  %522 = vmatprep.subr.mxu0 0.0
  %523 = vmatpush1.msra.mxu0 0.0
  %524 = vmatprep.mubr.f32.mxu0 0.0
  %525 = vmatmul.mubr.f32.gmra.mrb[0].mxu0 %v440
  %v526 = vpop.f32.mrb[0].mxu0
  %v527 = vadd.f32 %v335, %v526
  %v528 = vpop.f32.mrb[0].mxu0
  %529 = vmatprep.mubr.f32.mxu0 0.0
  %530 = vmatmul.mubr.f32.gmra.mrb[0].mxu0 %v443
  %v531 = vpop.f32.mrb[0].mxu0
  %v532 = vadd.f32 %v340, %v531
  %v533 = vpop.f32.mrb[0].mxu0
  %534 = vmatprep.mubr.f32.mxu0 0.0
  %535 = vmatmul.mubr.f32.gmra.mrb[0].mxu0 %v446
  %v536 = vpop.f32.mrb[0].mxu0
  %v537 = vadd.f32 %v345, %v536
  %v538 = vpop.f32.mrb[0].mxu0
  %539 = vmatprep.mubr.f32.mxu0 0.0
  %540 = vmatmul.mubr.f32.gmra.mrb[0].mxu0 %v449
  %v541 = vpop.f32.mrb[0].mxu0
  %v542 = vadd.f32 %v350, %v541
  %v543 = vpop.f32.mrb[0].mxu0
  %544 = vmatprep.mubr.f32.mxu0 0.0
  %545 = vmatmul.mubr.f32.gmra.mrb[0].mxu0 %v452
  %v546 = vpop.f32.mrb[0].mxu0
  %v547 = vadd.f32 %v355, %v546
  %v548 = vpop.f32.mrb[0].mxu0
  %549 = vmatprep.mubr.f32.mxu0 0.0
  %550 = vmatmul.mubr.f32.gmra.mrb[0].mxu0 %v455
  %v551 = vpop.f32.mrb[0].mxu0
  %v552 = vadd.f32 %v360, %v551
  %v553 = vpop.f32.mrb[0].mxu0
  %554 = vmatprep.mubr.f32.mxu0 0.0
  %555 = vmatmul.mubr.f32.gmra.mrb[0].mxu0 %v458
  %v556 = vpop.f32.mrb[0].mxu0
  %v557 = vadd.f32 %v365, %v556
  %v558 = vpop.f32.mrb[0].mxu0
  %559 = vdwg.mxu0
  %v560 = vmax.f32 %v527, 0.0
  %v561 = vmax.f32 %v532, 0.0
  %v562 = vmax.f32 %v537, 0.0
  %v563 = vmax.f32 %v542, 0.0
  %v564 = vmax.f32 %v547, 0.0
  %v565 = vmax.f32 %v552, 0.0
  %v566 = vmax.f32 %v557, 0.0
  %vm567 = vcmask 424960
  %v569 = vsel %vm567, %v387, 0
  %v572 = vsel %vm567, %v388, 0
  %vm574 = vcmask 1043456
  %v576 = vsel %vm574, %v566, 0
  %578 = vmatprep.subr.mxu0 0.0
  %579 = vmatpush1.msra.mxu0 %v560
  %580 = vmatprep.subr.mxu0 0.0
  %581 = vmatpush1.msra.mxu0 %v561
  %582 = vmatprep.subr.mxu0 0.0
  %583 = vmatpush1.msra.mxu0 %v562
  %584 = vmatprep.subr.mxu0 0.0
  %585 = vmatpush1.msra.mxu0 %v563
  %586 = vmatprep.subr.mxu0 0.0
  %587 = vmatpush1.msra.mxu0 %v564
  %588 = vmatprep.subr.mxu0 0.0
  %589 = vmatpush1.msra.mxu0 %v565
  %590 = vmatprep.subr.mxu0 0.0
  %591 = vmatpush1.msra.mxu0 %v576
  %592 = vmatprep.subr.mxu0 0.0
  %593 = vmatpush1.msra.mxu0 0.0
  %594 = vmatprep.subr.mxu0 0.0
  %595 = vmatpush1.msra.mxu0 0.0
  %596 = vmatprep.subr.mxu0 0.0
  %597 = vmatpush1.msra.mxu0 0.0
  %598 = vmatprep.subr.mxu0 0.0
  %599 = vmatpush1.msra.mxu0 0.0
  %600 = vmatprep.subr.mxu0 0.0
  %601 = vmatpush1.msra.mxu0 0.0
  %602 = vmatprep.subr.mxu0 0.0
  %603 = vmatpush1.msra.mxu0 0.0
  %604 = vmatprep.subr.mxu0 0.0
  %605 = vmatpush1.msra.mxu0 0.0
  %606 = vmatprep.subr.mxu0 0.0
  %607 = vmatpush1.msra.mxu0 0.0
  %608 = vmatprep.subr.mxu0 0.0
  %609 = vmatpush1.msra.mxu0 0.0
  %610 = vmatprep.subr.mxu0 0.0
  %611 = vmatpush1.msra.mxu0 0.0
  %612 = vmatprep.subr.mxu0 0.0
  %613 = vmatpush1.msra.mxu0 0.0
  %614 = vmatprep.subr.mxu0 0.0
  %615 = vmatpush1.msra.mxu0 0.0
  %616 = vmatprep.subr.mxu0 0.0
  %617 = vmatpush1.msra.mxu0 0.0
  %618 = vmatprep.subr.mxu0 0.0
  %619 = vmatpush1.msra.mxu0 0.0
  %620 = vmatprep.subr.mxu0 0.0
  %621 = vmatpush1.msra.mxu0 0.0
  %622 = vmatprep.subr.mxu0 0.0
  %623 = vmatpush1.msra.mxu0 0.0
  %624 = vmatprep.subr.mxu0 0.0
  %625 = vmatpush1.msra.mxu0 0.0
  %626 = vmatprep.subr.mxu0 0.0
  %627 = vmatpush1.msra.mxu0 0.0
  %628 = vmatprep.subr.mxu0 0.0
  %629 = vmatpush1.msra.mxu0 0.0
  %630 = vmatprep.subr.mxu0 0.0
  %631 = vmatpush1.msra.mxu0 0.0
  %632 = vmatprep.subr.mxu0 0.0
  %633 = vmatpush1.msra.mxu0 0.0
  %634 = vmatprep.subr.mxu0 0.0
  %635 = vmatpush1.msra.mxu0 0.0
  %636 = vmatprep.subr.mxu0 0.0
  %637 = vmatpush1.msra.mxu0 0.0
  %638 = vmatprep.subr.mxu0 0.0
  %639 = vmatpush1.msra.mxu0 0.0
  %640 = vmatprep.subr.mxu0 0.0
  %641 = vmatpush1.msra.mxu0 0.0
  %642 = vmatprep.mubr.f32.mxu0 0.0
  %643 = vmatmul.mubr.f32.gmra.mrb[0].mxu0 %v569
  %v644 = vpop.f32.mrb[0].mxu0
  %v645 = vadd.f32 0.0, %v644
  %v646 = vpop.f32.mrb[0].mxu0
  %647 = vmatprep.mubr.f32.mxu0 0.0
  %648 = vmatmul.mubr.f32.gmra.mrb[0].mxu0 %v572
  %v649 = vpop.f32.mrb[0].mxu0
  %v650 = vadd.f32 0.0, %v649
  %v651 = vpop.f32.mrb[0].mxu0
  %652 = vdwg.mxu0
  %s654 = vtos %v405
  %v655 = vstv %s654
  %v657 = vmul.f32 %v189, %v655
  %v658 = vmul.f32 %v194, %v655
  %v659 = vadd.f32 %v657, %v645
  %v660 = vadd.f32 %v658, %v650
  %v661 = vld [vmem:[%s2 + $0x30] sm:$0xff]
  %v662 = vld [vmem:[%s2 + $0x38] sm:$0xff]
  %v663 = vld [vmem:[%s2 + $0x40] sm:$0xff]
  %v664 = vld [vmem:[%s2 + $0x48] sm:$0xff]
  %v665 = vld [vmem:[%s2 + $0x70] sm:$0xff]
  %v666 = vld [vmem:[%s2 + $0x78] sm:$0xff]
  %v667 = vld [vmem:[%s2 + $0x80] sm:$0xff]
  %v668 = vld [vmem:[%s2 + $0x88] sm:$0xff]
  %v669 = vld [vmem:[%s2 + $0xb2] sm:$0x1]
  %v670 = vld [vmem:[%s2 + $0xb4] sm:$0x1]
  %v671 = vlaneseq
  %v672 = vshrl.u32 %v671, 7
  %v673 = vsub.s32 0, %v672
  %v674 = vrot.slane %v669, %v673
  %v676 = vsel %vm115, %v659, 0
  %v679 = vsel %vm115, %v660, 0
  %681 = vmatprep.subr.mxu0 0.0
  %682 = vmatpush1.msra.mxu0 %v661
  %683 = vmatprep.subr.mxu0 0.0
  %684 = vmatpush1.msra.mxu0 %v662
  %685 = vmatprep.subr.mxu0 0.0
  %686 = vmatpush1.msra.mxu0 %v663
  %687 = vmatprep.subr.mxu0 0.0
  %688 = vmatpush1.msra.mxu0 %v664
  %689 = vmatprep.subr.mxu0 0.0
  %690 = vmatpush1.msra.mxu0 0.0
  %691 = vmatprep.subr.mxu0 0.0
  %692 = vmatpush1.msra.mxu0 0.0
  %693 = vmatprep.subr.mxu0 0.0
  %694 = vmatpush1.msra.mxu0 0.0
  %695 = vmatprep.subr.mxu0 0.0
  %696 = vmatpush1.msra.mxu0 0.0
  %697 = vmatprep.subr.mxu0 0.0
  %698 = vmatpush1.msra.mxu0 0.0
  %699 = vmatprep.subr.mxu0 0.0
  %700 = vmatpush1.msra.mxu0 0.0
  %701 = vmatprep.subr.mxu0 0.0
  %702 = vmatpush1.msra.mxu0 0.0
  %703 = vmatprep.subr.mxu0 0.0
  %704 = vmatpush1.msra.mxu0 0.0
  %705 = vmatprep.subr.mxu0 0.0
  %706 = vmatpush1.msra.mxu0 0.0
  %707 = vmatprep.subr.mxu0 0.0
  %708 = vmatpush1.msra.mxu0 0.0
  %709 = vmatprep.subr.mxu0 0.0
  %710 = vmatpush1.msra.mxu0 0.0
  %711 = vmatprep.subr.mxu0 0.0
  %712 = vmatpush1.msra.mxu0 0.0
  %713 = vmatprep.subr.mxu0 0.0
  %714 = vmatpush1.msra.mxu0 0.0
  %715 = vmatprep.subr.mxu0 0.0
  %716 = vmatpush1.msra.mxu0 0.0
  %717 = vmatprep.subr.mxu0 0.0
  %718 = vmatpush1.msra.mxu0 0.0
  %719 = vmatprep.subr.mxu0 0.0
  %720 = vmatpush1.msra.mxu0 0.0
  %721 = vmatprep.subr.mxu0 0.0
  %722 = vmatpush1.msra.mxu0 0.0
  %723 = vmatprep.subr.mxu0 0.0
  %724 = vmatpush1.msra.mxu0 0.0
  %725 = vmatprep.subr.mxu0 0.0
  %726 = vmatpush1.msra.mxu0 0.0
  %727 = vmatprep.subr.mxu0 0.0
  %728 = vmatpush1.msra.mxu0 0.0
  %729 = vmatprep.subr.mxu0 0.0
  %730 = vmatpush1.msra.mxu0 0.0
  %731 = vmatprep.subr.mxu0 0.0
  %732 = vmatpush1.msra.mxu0 0.0
  %733 = vmatprep.subr.mxu0 0.0
  %734 = vmatpush1.msra.mxu0 0.0
  %735 = vmatprep.subr.mxu0 0.0
  %736 = vmatpush1.msra.mxu0 0.0
  %737 = vmatprep.subr.mxu0 0.0
  %738 = vmatpush1.msra.mxu0 0.0
  %739 = vmatprep.subr.mxu0 0.0
  %740 = vmatpush1.msra.mxu0 0.0
  %741 = vmatprep.subr.mxu0 0.0
  %742 = vmatpush1.msra.mxu0 0.0
  %743 = vmatprep.subr.mxu0 0.0
  %744 = vmatpush1.msra.mxu0 0.0
  %745 = vmatprep.mubr.f32.mxu0 0.0
  %746 = vmatmul.mubr.f32.gmra.mrb[0].mxu0 %v676
  %v747 = vpop.f32.mrb[0].mxu0
  %v748 = vadd.f32 %v674, %v747
  %v749 = vpop.f32.mrb[0].mxu0
  %750 = vmatprep.mubr.f32.mxu0 0.0
  %751 = vmatmul.mubr.f32.gmra.mrb[0].mxu0 %v679
  %v752 = vpop.f32.mrb[0].mxu0
  %v753 = vadd.f32 %v674, %v752
  %v754 = vpop.f32.mrb[0].mxu0
  %755 = vdwg.mxu0
  %v756 = vmax.f32 %v748, 0.0
  %v757 = vmax.f32 %v753, 0.0
  %v758 = vlaneseq
  %v759 = vshrl.u32 %v758, 7
  %v760 = vsub.s32 0, %v759
  %v761 = vrot.slane %v670, %v760
  %v763 = vsel %vm115, %v756, 0
  %v766 = vsel %vm115, %v757, 0
  %768 = vmatprep.subr.mxu0 0.0
  %769 = vmatpush1.msra.mxu0 %v665
  %770 = vmatprep.subr.mxu0 0.0
  %771 = vmatpush1.msra.mxu0 %v666
  %772 = vmatprep.subr.mxu0 0.0
  %773 = vmatpush1.msra.mxu0 %v667
  %774 = vmatprep.subr.mxu0 0.0
  %775 = vmatpush1.msra.mxu0 %v668
  %776 = vmatprep.subr.mxu0 0.0
  %777 = vmatpush1.msra.mxu0 0.0
  %778 = vmatprep.subr.mxu0 0.0
  %779 = vmatpush1.msra.mxu0 0.0
  %780 = vmatprep.subr.mxu0 0.0
  %781 = vmatpush1.msra.mxu0 0.0
  %782 = vmatprep.subr.mxu0 0.0
  %783 = vmatpush1.msra.mxu0 0.0
  %784 = vmatprep.subr.mxu0 0.0
  %785 = vmatpush1.msra.mxu0 0.0
  %786 = vmatprep.subr.mxu0 0.0
  %787 = vmatpush1.msra.mxu0 0.0
  %788 = vmatprep.subr.mxu0 0.0
  %789 = vmatpush1.msra.mxu0 0.0
  %790 = vmatprep.subr.mxu0 0.0
  %791 = vmatpush1.msra.mxu0 0.0
  %792 = vmatprep.subr.mxu0 0.0
  %793 = vmatpush1.msra.mxu0 0.0
  %794 = vmatprep.subr.mxu0 0.0
  %795 = vmatpush1.msra.mxu0 0.0
  %796 = vmatprep.subr.mxu0 0.0
  %797 = vmatpush1.msra.mxu0 0.0
  %798 = vmatprep.subr.mxu0 0.0
  %799 = vmatpush1.msra.mxu0 0.0
  %800 = vmatprep.subr.mxu0 0.0
  %801 = vmatpush1.msra.mxu0 0.0
  %802 = vmatprep.subr.mxu0 0.0
  %803 = vmatpush1.msra.mxu0 0.0
  %804 = vmatprep.subr.mxu0 0.0
  %805 = vmatpush1.msra.mxu0 0.0
  %806 = vmatprep.subr.mxu0 0.0
  %807 = vmatpush1.msra.mxu0 0.0
  %808 = vmatprep.subr.mxu0 0.0
  %809 = vmatpush1.msra.mxu0 0.0
  %810 = vmatprep.subr.mxu0 0.0
  %811 = vmatpush1.msra.mxu0 0.0
  %812 = vmatprep.subr.mxu0 0.0
  %813 = vmatpush1.msra.mxu0 0.0
  %814 = vmatprep.subr.mxu0 0.0
  %815 = vmatpush1.msra.mxu0 0.0
  %816 = vmatprep.subr.mxu0 0.0
  %817 = vmatpush1.msra.mxu0 0.0
  %818 = vmatprep.subr.mxu0 0.0
  %819 = vmatpush1.msra.mxu0 0.0
  %820 = vmatprep.subr.mxu0 0.0
  %821 = vmatpush1.msra.mxu0 0.0
  %822 = vmatprep.subr.mxu0 0.0
  %823 = vmatpush1.msra.mxu0 0.0
  %824 = vmatprep.subr.mxu0 0.0
  %825 = vmatpush1.msra.mxu0 0.0
  %826 = vmatprep.subr.mxu0 0.0
  %827 = vmatpush1.msra.mxu0 0.0
  %828 = vmatprep.subr.mxu0 0.0
  %829 = vmatpush1.msra.mxu0 0.0
  %830 = vmatprep.subr.mxu0 0.0
  %831 = vmatpush1.msra.mxu0 0.0
  %832 = vmatprep.mubr.f32.mxu0 0.0
  %833 = vmatmul.mubr.f32.gmra.mrb[0].mxu0 %v763
  %v834 = vpop.f32.mrb[0].mxu0
  %v835 = vadd.f32 %v761, %v834
  %v836 = vpop.f32.mrb[0].mxu0
  %837 = vmatprep.mubr.f32.mxu0 0.0
  %838 = vmatmul.mubr.f32.gmra.mrb[0].mxu0 %v766
  %v839 = vpop.f32.mrb[0].mxu0
  %v840 = vadd.f32 %v761, %v839
  %v841 = vpop.f32.mrb[0].mxu0
  %842 = vdwg.mxu0
  %v843 = vadd.f32 %v835, %v189
  %v844 = vadd.f32 %v840, %v194
  %847 = vrot.lane.b32.xlu0 %v843, 40
  %v848 = vpop.permute.xlu0 %847
  %849 = vrot.lane.b32.xlu0 %v844, 40
  %v850 = vpop.permute.xlu0 %849
  %vm853 = vcmask 589120
  %854 = vst.msk [vmem:[#allocation2] sm:$0xff] %vm853, %v848
  %855 = vst.msk [vmem:[#allocation2 + $0x8] sm:$0xff] %vm853, %v850
  %v856 = vld [vmem:[%s2 + $0xb6] sm:$0x1]
  %v857 = vadd.f32 %v856, 1.0
  %858 = vmatprep.subr.mxu0 0.0
  %859 = vmatpush1.msra.mxu0 %v843
  %860 = vmatprep.subr.mxu0 0.0
  %861 = vmatpush1.msra.mxu0 %v844
  %862 = vmatprep.subr.mxu0 0.0
  %863 = vmatpush1.msra.mxu0 0.0
  %864 = vmatprep.subr.mxu0 0.0
  %865 = vmatpush1.msra.mxu0 0.0
  %866 = vmatprep.subr.mxu0 0.0
  %867 = vmatpush1.msra.mxu0 0.0
  %868 = vmatprep.subr.mxu0 0.0
  %869 = vmatpush1.msra.mxu0 0.0
  %870 = vmatprep.subr.mxu0 0.0
  %871 = vmatpush1.msra.mxu0 0.0
  %872 = vmatprep.subr.mxu0 0.0
  %873 = vmatpush1.msra.mxu0 0.0
  %874 = vmatprep.subr.mxu0 0.0
  %875 = vmatpush1.msra.mxu0 0.0
  %876 = vmatprep.subr.mxu0 0.0
  %877 = vmatpush1.msra.mxu0 0.0
  %878 = vmatprep.subr.mxu0 0.0
  %879 = vmatpush1.msra.mxu0 0.0
  %880 = vmatprep.subr.mxu0 0.0
  %881 = vmatpush1.msra.mxu0 0.0
  %882 = vmatprep.subr.mxu0 0.0
  %883 = vmatpush1.msra.mxu0 0.0
  %884 = vmatprep.subr.mxu0 0.0
  %885 = vmatpush1.msra.mxu0 0.0
  %886 = vmatprep.subr.mxu0 0.0
  %887 = vmatpush1.msra.mxu0 0.0
  %888 = vmatprep.subr.mxu0 0.0
  %889 = vmatpush1.msra.mxu0 0.0
  %890 = vmatprep.subr.mxu0 0.0
  %891 = vmatpush1.msra.mxu0 0.0
  %892 = vmatprep.subr.mxu0 0.0
  %893 = vmatpush1.msra.mxu0 0.0
  %894 = vmatprep.subr.mxu0 0.0
  %895 = vmatpush1.msra.mxu0 0.0
  %896 = vmatprep.subr.mxu0 0.0
  %897 = vmatpush1.msra.mxu0 0.0
  %898 = vmatprep.subr.mxu0 0.0
  %899 = vmatpush1.msra.mxu0 0.0
  %900 = vmatprep.subr.mxu0 0.0
  %901 = vmatpush1.msra.mxu0 0.0
  %902 = vmatprep.subr.mxu0 0.0
  %903 = vmatpush1.msra.mxu0 0.0
  %904 = vmatprep.subr.mxu0 0.0
  %905 = vmatpush1.msra.mxu0 0.0
  %906 = vmatprep.subr.mxu0 0.0
  %907 = vmatpush1.msra.mxu0 0.0
  %908 = vmatprep.subr.mxu0 0.0
  %909 = vmatpush1.msra.mxu0 0.0
  %910 = vmatprep.subr.mxu0 0.0
  %911 = vmatpush1.msra.mxu0 0.0
  %912 = vmatprep.subr.mxu0 0.0
  %913 = vmatpush1.msra.mxu0 0.0
  %914 = vmatprep.subr.mxu0 0.0
  %915 = vmatpush1.msra.mxu0 0.0
  %916 = vmatprep.subr.mxu0 0.0
  %917 = vmatpush1.msra.mxu0 0.0
  %918 = vmatprep.subr.mxu0 0.0
  %919 = vmatpush1.msra.mxu0 0.0
  %920 = vmatprep.subr.mxu0 0.0
  %921 = vmatpush1.msra.mxu0 0.0
  %922 = vmatprep.mubr.f32.mxu0 0.0
  %923 = vmatmul.mubr.f32.gmra.mrb[0].mxu0 %v440
  %v924 = vpop.f32.mrb[0].mxu0
  %v925 = vadd.f32 %v335, %v924
  %v926 = vpop.f32.mrb[0].mxu0
  %927 = vmatprep.mubr.f32.mxu0 0.0
  %928 = vmatmul.mubr.f32.gmra.mrb[0].mxu0 %v443
  %v929 = vpop.f32.mrb[0].mxu0
  %v930 = vadd.f32 %v340, %v929
  %v931 = vpop.f32.mrb[0].mxu0
  %932 = vmatprep.mubr.f32.mxu0 0.0
  %933 = vmatmul.mubr.f32.gmra.mrb[0].mxu0 %v446
  %v934 = vpop.f32.mrb[0].mxu0
  %v935 = vadd.f32 %v345, %v934
  %v936 = vpop.f32.mrb[0].mxu0
  %937 = vmatprep.mubr.f32.mxu0 0.0
  %938 = vmatmul.mubr.f32.gmra.mrb[0].mxu0 %v449
  %v939 = vpop.f32.mrb[0].mxu0
  %v940 = vadd.f32 %v350, %v939
  %v941 = vpop.f32.mrb[0].mxu0
  %942 = vmatprep.mubr.f32.mxu0 0.0
  %943 = vmatmul.mubr.f32.gmra.mrb[0].mxu0 %v452
  %v944 = vpop.f32.mrb[0].mxu0
  %v945 = vadd.f32 %v355, %v944
  %v946 = vpop.f32.mrb[0].mxu0
  %947 = vmatprep.mubr.f32.mxu0 0.0
  %948 = vmatmul.mubr.f32.gmra.mrb[0].mxu0 %v455
  %v949 = vpop.f32.mrb[0].mxu0
  %v950 = vadd.f32 %v360, %v949
  %v951 = vpop.f32.mrb[0].mxu0
  %952 = vmatprep.mubr.f32.mxu0 0.0
  %953 = vmatmul.mubr.f32.gmra.mrb[0].mxu0 %v458
  %v954 = vpop.f32.mrb[0].mxu0
  %v955 = vadd.f32 %v365, %v954
  %v956 = vpop.f32.mrb[0].mxu0
  %957 = vdwg.mxu0
  %v958 = vmax.f32 %v925, 0.0
  %v959 = vmax.f32 %v930, 0.0
  %v960 = vmax.f32 %v935, 0.0
  %v961 = vmax.f32 %v940, 0.0
  %v962 = vmax.f32 %v945, 0.0
  %v963 = vmax.f32 %v950, 0.0
  %v964 = vmax.f32 %v955, 0.0
  %v966 = vsel %vm574, %v964, 0
  %968 = vmatprep.subr.mxu0 0.0
  %969 = vmatpush1.msra.mxu0 %v958
  %970 = vmatprep.subr.mxu0 0.0
  %971 = vmatpush1.msra.mxu0 %v959
  %972 = vmatprep.subr.mxu0 0.0
  %973 = vmatpush1.msra.mxu0 %v960
  %974 = vmatprep.subr.mxu0 0.0
  %975 = vmatpush1.msra.mxu0 %v961
  %976 = vmatprep.subr.mxu0 0.0
  %977 = vmatpush1.msra.mxu0 %v962
  %978 = vmatprep.subr.mxu0 0.0
  %979 = vmatpush1.msra.mxu0 %v963
  %980 = vmatprep.subr.mxu0 0.0
  %981 = vmatpush1.msra.mxu0 %v966
  %982 = vmatprep.subr.mxu0 0.0
  %983 = vmatpush1.msra.mxu0 0.0
  %984 = vmatprep.subr.mxu0 0.0
  %985 = vmatpush1.msra.mxu0 0.0
  %986 = vmatprep.subr.mxu0 0.0
  %987 = vmatpush1.msra.mxu0 0.0
  %988 = vmatprep.subr.mxu0 0.0
  %989 = vmatpush1.msra.mxu0 0.0
  %990 = vmatprep.subr.mxu0 0.0
  %991 = vmatpush1.msra.mxu0 0.0
  %992 = vmatprep.subr.mxu0 0.0
  %993 = vmatpush1.msra.mxu0 0.0
  %994 = vmatprep.subr.mxu0 0.0
  %995 = vmatpush1.msra.mxu0 0.0
  %996 = vmatprep.subr.mxu0 0.0
  %997 = vmatpush1.msra.mxu0 0.0
  %998 = vmatprep.subr.mxu0 0.0
  %999 = vmatpush1.msra.mxu0 0.0
  %1000 = vmatprep.subr.mxu0 0.0
  %1001 = vmatpush1.msra.mxu0 0.0
  %1002 = vmatprep.subr.mxu0 0.0
  %1003 = vmatpush1.msra.mxu0 0.0
  %1004 = vmatprep.subr.mxu0 0.0
  %1005 = vmatpush1.msra.mxu0 0.0
  %1006 = vmatprep.subr.mxu0 0.0
  %1007 = vmatpush1.msra.mxu0 0.0
  %1008 = vmatprep.subr.mxu0 0.0
  %1009 = vmatpush1.msra.mxu0 0.0
  %1010 = vmatprep.subr.mxu0 0.0
  %1011 = vmatpush1.msra.mxu0 0.0
  %1012 = vmatprep.subr.mxu0 0.0
  %1013 = vmatpush1.msra.mxu0 0.0
  %1014 = vmatprep.subr.mxu0 0.0
  %1015 = vmatpush1.msra.mxu0 0.0
  %1016 = vmatprep.subr.mxu0 0.0
  %1017 = vmatpush1.msra.mxu0 0.0
  %1018 = vmatprep.subr.mxu0 0.0
  %1019 = vmatpush1.msra.mxu0 0.0
  %1020 = vmatprep.subr.mxu0 0.0
  %1021 = vmatpush1.msra.mxu0 0.0
  %1022 = vmatprep.subr.mxu0 0.0
  %1023 = vmatpush1.msra.mxu0 0.0
  %1024 = vmatprep.subr.mxu0 0.0
  %1025 = vmatpush1.msra.mxu0 0.0
  %1026 = vmatprep.subr.mxu0 0.0
  %1027 = vmatpush1.msra.mxu0 0.0
  %1028 = vmatprep.subr.mxu0 0.0
  %1029 = vmatpush1.msra.mxu0 0.0
  %1030 = vmatprep.subr.mxu0 0.0
  %1031 = vmatpush1.msra.mxu0 0.0
  %1032 = vmatprep.mubr.f32.mxu0 0.0
  %1033 = vmatmul.mubr.f32.gmra.mrb[0].mxu0 %v569
  %v1034 = vpop.f32.mrb[0].mxu0
  %v1035 = vadd.f32 0.0, %v1034
  %v1036 = vpop.f32.mrb[0].mxu0
  %1037 = vmatprep.mubr.f32.mxu0 0.0
  %1038 = vmatmul.mubr.f32.gmra.mrb[0].mxu0 %v572
  %v1039 = vpop.f32.mrb[0].mxu0
  %v1040 = vadd.f32 0.0, %v1039
  %v1041 = vpop.f32.mrb[0].mxu0
  %1042 = vdwg.mxu0
  %1044 = vrot.lane.b32.xlu0 %v857, 127
  %v1045 = vpop.permute.xlu0 %1044
  %s1046 = vtos %v1045
  %v1047 = vstv %s1046
  %v1049 = vmul.f32 %v843, %v1047
  %v1050 = vmul.f32 %v844, %v1047
  %v1051 = vadd.f32 %v1049, %v1035
  %v1052 = vadd.f32 %v1050, %v1040
  %v1053 = vld [vmem:[%s2 + $0x50] sm:$0xff]
  %v1054 = vld [vmem:[%s2 + $0x58] sm:$0xff]
  %v1055 = vld [vmem:[%s2 + $0x60] sm:$0xff]
  %v1056 = vld [vmem:[%s2 + $0x68] sm:$0xff]
  %v1057 = vld [vmem:[%s2 + $0x90] sm:$0xff]
  %v1058 = vld [vmem:[%s2 + $0x98] sm:$0xff]
  %v1059 = vld [vmem:[%s2 + $0xa0] sm:$0xff]
  %v1060 = vld [vmem:[%s2 + $0xa8] sm:$0xff]
  %v1061 = vld [vmem:[%s2 + $0xb3] sm:$0x1]
  %v1062 = vld [vmem:[%s2 + $0xb5] sm:$0x1]
  %v1063 = vlaneseq
  %v1064 = vshrl.u32 %v1063, 7
  %v1065 = vsub.s32 0, %v1064
  %v1066 = vrot.slane %v1061, %v1065
  %v1068 = vsel %vm115, %v1051, 0
  %v1071 = vsel %vm115, %v1052, 0
  %1073 = vmatprep.subr.mxu0 0.0
  %1074 = vmatpush1.msra.mxu0 %v1053
  %1075 = vmatprep.subr.mxu0 0.0
  %1076 = vmatpush1.msra.mxu0 %v1054
  %1077 = vmatprep.subr.mxu0 0.0
  %1078 = vmatpush1.msra.mxu0 %v1055
  %1079 = vmatprep.subr.mxu0 0.0
  %1080 = vmatpush1.msra.mxu0 %v1056
  %1081 = vmatprep.subr.mxu0 0.0
  %1082 = vmatpush1.msra.mxu0 0.0
  %1083 = vmatprep.subr.mxu0 0.0
  %1084 = vmatpush1.msra.mxu0 0.0
  %1085 = vmatprep.subr.mxu0 0.0
  %1086 = vmatpush1.msra.mxu0 0.0
  %1087 = vmatprep.subr.mxu0 0.0
  %1088 = vmatpush1.msra.mxu0 0.0
  %1089 = vmatprep.subr.mxu0 0.0
  %1090 = vmatpush1.msra.mxu0 0.0
  %1091 = vmatprep.subr.mxu0 0.0
  %1092 = vmatpush1.msra.mxu0 0.0
  %1093 = vmatprep.subr.mxu0 0.0
  %1094 = vmatpush1.msra.mxu0 0.0
  %1095 = vmatprep.subr.mxu0 0.0
  %1096 = vmatpush1.msra.mxu0 0.0
  %1097 = vmatprep.subr.mxu0 0.0
  %1098 = vmatpush1.msra.mxu0 0.0
  %1099 = vmatprep.subr.mxu0 0.0
  %1100 = vmatpush1.msra.mxu0 0.0
  %1101 = vmatprep.subr.mxu0 0.0
  %1102 = vmatpush1.msra.mxu0 0.0
  %1103 = vmatprep.subr.mxu0 0.0
  %1104 = vmatpush1.msra.mxu0 0.0
  %1105 = vmatprep.subr.mxu0 0.0
  %1106 = vmatpush1.msra.mxu0 0.0
  %1107 = vmatprep.subr.mxu0 0.0
  %1108 = vmatpush1.msra.mxu0 0.0
  %1109 = vmatprep.subr.mxu0 0.0
  %1110 = vmatpush1.msra.mxu0 0.0
  %1111 = vmatprep.subr.mxu0 0.0
  %1112 = vmatpush1.msra.mxu0 0.0
  %1113 = vmatprep.subr.mxu0 0.0
  %1114 = vmatpush1.msra.mxu0 0.0
  %1115 = vmatprep.subr.mxu0 0.0
  %1116 = vmatpush1.msra.mxu0 0.0
  %1117 = vmatprep.subr.mxu0 0.0
  %1118 = vmatpush1.msra.mxu0 0.0
  %1119 = vmatprep.subr.mxu0 0.0
  %1120 = vmatpush1.msra.mxu0 0.0
  %1121 = vmatprep.subr.mxu0 0.0
  %1122 = vmatpush1.msra.mxu0 0.0
  %1123 = vmatprep.subr.mxu0 0.0
  %1124 = vmatpush1.msra.mxu0 0.0
  %1125 = vmatprep.subr.mxu0 0.0
  %1126 = vmatpush1.msra.mxu0 0.0
  %1127 = vmatprep.subr.mxu0 0.0
  %1128 = vmatpush1.msra.mxu0 0.0
  %1129 = vmatprep.subr.mxu0 0.0
  %1130 = vmatpush1.msra.mxu0 0.0
  %1131 = vmatprep.subr.mxu0 0.0
  %1132 = vmatpush1.msra.mxu0 0.0
  %1133 = vmatprep.subr.mxu0 0.0
  %1134 = vmatpush1.msra.mxu0 0.0
  %1135 = vmatprep.subr.mxu0 0.0
  %1136 = vmatpush1.msra.mxu0 0.0
  %1137 = vmatprep.mubr.f32.mxu0 0.0
  %1138 = vmatmul.mubr.f32.gmra.mrb[0].mxu0 %v1068
  %v1139 = vpop.f32.mrb[0].mxu0
  %v1140 = vadd.f32 %v1066, %v1139
  %v1141 = vpop.f32.mrb[0].mxu0
  %1142 = vmatprep.mubr.f32.mxu0 0.0
  %1143 = vmatmul.mubr.f32.gmra.mrb[0].mxu0 %v1071
  %v1144 = vpop.f32.mrb[0].mxu0
  %v1145 = vadd.f32 %v1066, %v1144
  %v1146 = vpop.f32.mrb[0].mxu0
  %1147 = vdwg.mxu0
  %v1148 = vmax.f32 %v1140, 0.0
  %v1149 = vmax.f32 %v1145, 0.0
  %v1150 = vlaneseq
  %v1151 = vshrl.u32 %v1150, 7
  %v1152 = vsub.s32 0, %v1151
  %v1153 = vrot.slane %v1062, %v1152
  %v1155 = vsel %vm115, %v1148, 0
  %v1158 = vsel %vm115, %v1149, 0
  %1160 = vmatprep.subr.mxu0 0.0
  %1161 = vmatpush1.msra.mxu0 %v1057
  %1162 = vmatprep.subr.mxu0 0.0
  %1163 = vmatpush1.msra.mxu0 %v1058
  %1164 = vmatprep.subr.mxu0 0.0
  %1165 = vmatpush1.msra.mxu0 %v1059
  %1166 = vmatprep.subr.mxu0 0.0
  %1167 = vmatpush1.msra.mxu0 %v1060
  %1168 = vmatprep.subr.mxu0 0.0
  %1169 = vmatpush1.msra.mxu0 0.0
  %1170 = vmatprep.subr.mxu0 0.0
  %1171 = vmatpush1.msra.mxu0 0.0
  %1172 = vmatprep.subr.mxu0 0.0
  %1173 = vmatpush1.msra.mxu0 0.0
  %1174 = vmatprep.subr.mxu0 0.0
  %1175 = vmatpush1.msra.mxu0 0.0
  %1176 = vmatprep.subr.mxu0 0.0
  %1177 = vmatpush1.msra.mxu0 0.0
  %1178 = vmatprep.subr.mxu0 0.0
  %1179 = vmatpush1.msra.mxu0 0.0
  %1180 = vmatprep.subr.mxu0 0.0
  %1181 = vmatpush1.msra.mxu0 0.0
  %1182 = vmatprep.subr.mxu0 0.0
  %1183 = vmatpush1.msra.mxu0 0.0
  %1184 = vmatprep.subr.mxu0 0.0
  %1185 = vmatpush1.msra.mxu0 0.0
  %1186 = vmatprep.subr.mxu0 0.0
  %1187 = vmatpush1.msra.mxu0 0.0
  %1188 = vmatprep.subr.mxu0 0.0
  %1189 = vmatpush1.msra.mxu0 0.0
  %1190 = vmatprep.subr.mxu0 0.0
  %1191 = vmatpush1.msra.mxu0 0.0
  %1192 = vmatprep.subr.mxu0 0.0
  %1193 = vmatpush1.msra.mxu0 0.0
  %1194 = vmatprep.subr.mxu0 0.0
  %1195 = vmatpush1.msra.mxu0 0.0
  %1196 = vmatprep.subr.mxu0 0.0
  %1197 = vmatpush1.msra.mxu0 0.0
  %1198 = vmatprep.subr.mxu0 0.0
  %1199 = vmatpush1.msra.mxu0 0.0
  %1200 = vmatprep.subr.mxu0 0.0
  %1201 = vmatpush1.msra.mxu0 0.0
  %1202 = vmatprep.subr.mxu0 0.0
  %1203 = vmatpush1.msra.mxu0 0.0
  %1204 = vmatprep.subr.mxu0 0.0
  %1205 = vmatpush1.msra.mxu0 0.0
  %1206 = vmatprep.subr.mxu0 0.0
  %1207 = vmatpush1.msra.mxu0 0.0
  %1208 = vmatprep.subr.mxu0 0.0
  %1209 = vmatpush1.msra.mxu0 0.0
  %1210 = vmatprep.subr.mxu0 0.0
  %1211 = vmatpush1.msra.mxu0 0.0
  %1212 = vmatprep.subr.mxu0 0.0
  %1213 = vmatpush1.msra.mxu0 0.0
  %1214 = vmatprep.subr.mxu0 0.0
  %1215 = vmatpush1.msra.mxu0 0.0
  %1216 = vmatprep.subr.mxu0 0.0
  %1217 = vmatpush1.msra.mxu0 0.0
  %1218 = vmatprep.subr.mxu0 0.0
  %1219 = vmatpush1.msra.mxu0 0.0
  %1220 = vmatprep.subr.mxu0 0.0
  %1221 = vmatpush1.msra.mxu0 0.0
  %1222 = vmatprep.subr.mxu0 0.0
  %1223 = vmatpush1.msra.mxu0 0.0
  %1224 = vmatprep.mubr.f32.mxu0 0.0
  %1225 = vmatmul.mubr.f32.gmra.mrb[0].mxu0 %v1155
  %v1226 = vpop.f32.mrb[0].mxu0
  %v1227 = vadd.f32 %v1153, %v1226
  %v1228 = vpop.f32.mrb[0].mxu0
  %1229 = vmatprep.mubr.f32.mxu0 0.0
  %1230 = vmatmul.mubr.f32.gmra.mrb[0].mxu0 %v1158
  %v1231 = vpop.f32.mrb[0].mxu0
  %v1232 = vadd.f32 %v1153, %v1231
  %v1233 = vpop.f32.mrb[0].mxu0
  %1234 = vdwg.mxu0
  %v1235 = vadd.f32 %v1227, %v843
  %v1236 = vadd.f32 %v1232, %v844
  %1239 = vrot.lane.b32.xlu0 %v1235, 72
  %v1240 = vpop.permute.xlu0 %1239
  %1241 = vrot.lane.b32.xlu0 %v1236, 72
  %v1242 = vpop.permute.xlu0 %1241
  %vm1245 = vcmask 851520
  %1246 = vst.msk [vmem:[#allocation2] sm:$0xff] %vm1245, %v1240
  %1247 = vst.msk [vmem:[#allocation2 + $0x8] sm:$0xff] %vm1245, %v1242
  %v1248 = vld [vmem:[#allocation2] sm:$0xff]
  %v1249 = vld [vmem:[#allocation2 + $0x8] sm:$0xff]
  %v1250 = vlaneseq
  %v1251 = vand.u32 %v1250, 127
  %v1252 = vmul.u32 %v201, 8
  %vm1253 = vcmp.ge.s32.totalorder %v1251, %v1252
  %v1254 = vadd.s32 %v201, 1
  %v1255 = vmul.u32 %v1254, 8
  %vm1256 = vcmp.lt.s32.totalorder %v1251, %v1255
  %vm1257 = vmand %vm1253, %vm1256
  %v1258 = vsel %vm1257, 1, 0
  %v1259 = vcvt.s32.f32 %v1258
  %v1260 = vmul.f32 %v1259, 0.125
  %v1262 = vsel %vm438, %v1260, 0
  %1264 = vmatprep.subr.mxu0 0.0
  %1265 = vmatpush1.msra.mxu0 %v1248
  %1266 = vmatprep.subr.mxu0 0.0
  %1267 = vmatpush1.msra.mxu0 %v1249
  %1268 = vmatprep.subr.mxu0 0.0
  %1269 = vmatpush1.msra.mxu0 0.0
  %1270 = vmatprep.subr.mxu0 0.0
  %1271 = vmatpush1.msra.mxu0 0.0
  %1272 = vmatprep.subr.mxu0 0.0
  %1273 = vmatpush1.msra.mxu0 0.0
  %1274 = vmatprep.subr.mxu0 0.0
  %1275 = vmatpush1.msra.mxu0 0.0
  %1276 = vmatprep.subr.mxu0 0.0
  %1277 = vmatpush1.msra.mxu0 0.0
  %1278 = vmatprep.subr.mxu0 0.0
  %1279 = vmatpush1.msra.mxu0 0.0
  %1280 = vmatprep.subr.mxu0 0.0
  %1281 = vmatpush1.msra.mxu0 0.0
  %1282 = vmatprep.subr.mxu0 0.0
  %1283 = vmatpush1.msra.mxu0 0.0
  %1284 = vmatprep.subr.mxu0 0.0
  %1285 = vmatpush1.msra.mxu0 0.0
  %1286 = vmatprep.subr.mxu0 0.0
  %1287 = vmatpush1.msra.mxu0 0.0
  %1288 = vmatprep.subr.mxu0 0.0
  %1289 = vmatpush1.msra.mxu0 0.0
  %1290 = vmatprep.subr.mxu0 0.0
  %1291 = vmatpush1.msra.mxu0 0.0
  %1292 = vmatprep.subr.mxu0 0.0
  %1293 = vmatpush1.msra.mxu0 0.0
  %1294 = vmatprep.subr.mxu0 0.0
  %1295 = vmatpush1.msra.mxu0 0.0
  %1296 = vmatprep.subr.mxu0 0.0
  %1297 = vmatpush1.msra.mxu0 0.0
  %1298 = vmatprep.subr.mxu0 0.0
  %1299 = vmatpush1.msra.mxu0 0.0
  %1300 = vmatprep.subr.mxu0 0.0
  %1301 = vmatpush1.msra.mxu0 0.0
  %1302 = vmatprep.subr.mxu0 0.0
  %1303 = vmatpush1.msra.mxu0 0.0
  %1304 = vmatprep.subr.mxu0 0.0
  %1305 = vmatpush1.msra.mxu0 0.0
  %1306 = vmatprep.subr.mxu0 0.0
  %1307 = vmatpush1.msra.mxu0 0.0
  %1308 = vmatprep.subr.mxu0 0.0
  %1309 = vmatpush1.msra.mxu0 0.0
  %1310 = vmatprep.subr.mxu0 0.0
  %1311 = vmatpush1.msra.mxu0 0.0
  %1312 = vmatprep.subr.mxu0 0.0
  %1313 = vmatpush1.msra.mxu0 0.0
  %1314 = vmatprep.subr.mxu0 0.0
  %1315 = vmatpush1.msra.mxu0 0.0
  %1316 = vmatprep.subr.mxu0 0.0
  %1317 = vmatpush1.msra.mxu0 0.0
  %1318 = vmatprep.subr.mxu0 0.0
  %1319 = vmatpush1.msra.mxu0 0.0
  %1320 = vmatprep.subr.mxu0 0.0
  %1321 = vmatpush1.msra.mxu0 0.0
  %1322 = vmatprep.subr.mxu0 0.0
  %1323 = vmatpush1.msra.mxu0 0.0
  %1324 = vmatprep.subr.mxu0 0.0
  %1325 = vmatpush1.msra.mxu0 0.0
  %1326 = vmatprep.subr.mxu0 0.0
  %1327 = vmatpush1.msra.mxu0 0.0
  %1328 = vmatprep.mubr.f32.mxu0 0.0
  %1329 = vmatmul.mubr.f32.gmra.mrb[0].mxu0 %v1262
  %v1330 = vpop.f32.mrb[0].mxu0
  %v1331 = vadd.f32 0.0, %v1330
  %v1332 = vpop.f32.mrb[0].mxu0
  %1333 = vdwg.mxu0
  %1334 = vst [vmem:[%s3] sm:$0xff] 0.0
  %1335 = vst [vmem:[%s3 + $0x8] sm:$0xff] 0.0
  %1336 = vst [vmem:[%s3 + $0x10] sm:$0xf] 0.0
  %1337 = vst [vmem:[%s3 + $0x18] sm:$0xf] 0.0
  %1338 = vst [vmem:[%s3 + $0x20] sm:$0xff] 0.0
  %1339 = vst [vmem:[%s3 + $0x28] sm:$0xff] 0.0
  %1340 = vst [vmem:[%s3 + $0x30] sm:$0xf] 0.0
  %1341 = vst [vmem:[%s3 + $0x38] sm:$0xf] 0.0
  %1342 = vst [vmem:[%s3] sm:$0xff] %v1248
  %1343 = vst [vmem:[%s3 + $0x20] sm:$0xff] %v1249
  %v1346 = vunpack.c.l.s4 1966171168
  %v1347 = vunpack.c.0.s8 %v1346
  %v1348 = vlaneseq
  %v1349 = vshrl.u32 %v1348, 7
  %v1350 = vsub.s32 %v1347, %v1349
  %v1351 = vrot.slane %v1331, %v1350
  %v1352 = vcombine.high %v1351, %v1351
  %v1354 = vunpack.c.l.s4 1966171168
  %v1355 = vunpack.c.0.s8 %v1354
  %v1356 = vlaneseq
  %v1357 = vshrl.u32 %v1356, 7
  %v1358 = vsub.s32 %v1355, %v1357
  %v1359 = vrot.slane %v1351, %v1358
  %v1361 = vunpack.c.l.s4 1966171168
  %v1362 = vunpack.c.0.s8 %v1361
  %v1363 = vlaneseq
  %v1364 = vshrl.u32 %v1363, 7
  %v1365 = vsub.s32 %v1362, %v1364
  %v1366 = vrot.slane %v1352, %v1365
  %v1367 = vlaneseq
  %v1368 = vshrl.u32 %v1367, 7
  %v1369 = vsub.s32 0, %v1368
  %v1370 = vrot.slane %v1359, %v1369
  %v1371 = vlaneseq
  %v1372 = vshrl.u32 %v1371, 7
  %v1373 = vsub.s32 0, %v1372
  %v1374 = vrot.slane %v1366, %v1373
  %1377 = vst [vmem:[%s3 + $0x8] sm:$0xff] %v1370
  %1378 = vst [vmem:[%s3 + $0x18] sm:$0xf] %v1370
  %1379 = vst [vmem:[%s3 + $0x28] sm:$0xff] %v1374
  %1380 = vst [vmem:[%s3 + $0x38] sm:$0xf] %v1374
  // Predicated region
  $region14: #{tpu_custom_call.1} parent=0 // pred_check
    _
  $region15: #{tpu_custom_call.1} parent=0 // pred_check_branch
    %1382 = sbr.rel (0) target = $region17
  $region16: #{tpu_custom_call.1} parent=0 // pred_region
    _
  $region17: #{tpu_custom_call.1} parent=0 // pred_fallthru
    _
  // Predicated region
  $region18: #{tpu_custom_call.1} parent=0 // pred_check
    _
  $region19: #{tpu_custom_call.1} parent=0 // pred_check_branch
    %1384 = sbr.rel (0) target = $region21
  $region20: #{tpu_custom_call.1} parent=0 // pred_region
    _
  $region21: #{tpu_custom_call.1} parent=0 // pred_fallthru
    _

</llo_original>
